<compile_context>
chip_gen: v5e
topology: v5e:2x2
jax: 0.10.0
libtpu: 0.0.40
codegen_flags: <defaults>
</compile_context>

<pallas_src>
import functools

import jax
import jax.numpy as jnp
from jax import lax
from jax.experimental import pallas as pl
from jax.experimental.pallas import tpu as pltpu


# ---------------------------------------------------------------------------
# Kernel helpers
# ---------------------------------------------------------------------------
def _tile_prologue(tile_base, len_ref, x_ref, wih_hbm, whh_hbm, bi_hbm, bhn_hbm,
                   h_ref, gir_ref, giz_ref, gin_ref, m_ref,
                   wih_v, whh_v, bi_v, bhn_v, sem, H):
    """Shared per-tile setup: one-time weight DMA, validity mask, hoisted projection."""
    tile_t, B, D = x_ref.shape

    @pl.when(pl.program_id(0) == 0)
    def _():
        h_ref[...] = jnp.zeros_like(h_ref)
        # Single-buffer the grid-invariant weights/biases: DMA HBM -> VMEM once.
        for src, dst in ((wih_hbm, wih_v), (whh_hbm, whh_v),
                         (bi_hbm, bi_v), (bhn_hbm, bhn_v)):
            cp = pltpu.make_async_copy(src, dst, sem)
            cp.start()
            cp.wait()

    # Validity mask computed in-kernel (replaces the old (T,B,1) HBM mask stream).
    t_idx = lax.broadcasted_iota(jnp.int32, (tile_t, B, 1), 0) + tile_base
    m_ref[...] = (t_idx < len_ref[...]).astype(jnp.float32)

    # Hoisted input projection: one (tile_t*B, D) x (D, 3H) bf16 MXU matmul per tile,
    # split once into lane-dense per-gate slabs so the recurrence indexes leading dims.
    x_flat = x_ref[...].reshape(tile_t * B, D)
    gi = jnp.dot(x_flat, wih_v[...], preferred_element_type=jnp.float32) + bi_v[...]
    gi = gi.reshape(tile_t, B, 3 * H)
    gir_ref[...] = gi[:, :, 0:H]
    giz_ref[...] = gi[:, :, H:2 * H]
    gin_ref[...] = gi[:, :, 2 * H:]


def _gru_cell(h, gi_r, gi_z, gi_n, whh_bf16, bhn, H):
    """One GRU step: bf16 MXU h-projection, f32 gate math (PyTorch gate order r|z|n)."""
    gh = jnp.dot(h.astype(jnp.bfloat16), whh_bf16, preferred_element_type=jnp.float32)
    r = jax.nn.sigmoid(gi_r + gh[:, 0:H])
    z = jax.nn.sigmoid(gi_z + gh[:, H:2 * H])
    n = jnp.tanh(gi_n + r * (gh[:, 2 * H:] + bhn))
    return (1.0 - z) * n + z * h


# ---------------------------------------------------------------------------
# Kernels
# ---------------------------------------------------------------------------
def gru_fwd_kernel(len_ref, x_ref, wih_hbm, whh_hbm, bi_hbm, bhn_hbm, out_ref,
                   h_ref, gir_ref, giz_ref, gin_ref, m_ref,
                   wih_v, whh_v, bi_v, bhn_v, sem, *, hidden, unroll):
    """Forward-direction GRU over one time tile; output (padded positions = 0) in bf16."""
    tile_t, B, D = x_ref.shape
    H = hidden
    tile_base = pl.program_id(0) * tile_t

    _tile_prologue(tile_base, len_ref, x_ref, wih_hbm, whh_hbm, bi_hbm, bhn_hbm,
                   h_ref, gir_ref, giz_ref, gin_ref, m_ref,
                   wih_v, whh_v, bi_v, bhn_v, sem, H)

    whh = whh_v[...]
    bhn = bhn_v[...]

    def step(t, h):
        valid = m_ref[t] > 0.0                                     # (B, 1)
        h_new = _gru_cell(h, gir_ref[t], giz_ref[t], gin_ref[t], whh, bhn, H)
        h = jnp.where(valid, h_new, h)                             # advance only on valid tokens
        out_ref[t] = jnp.where(valid, h, 0.0).astype(out_ref.dtype)  # pad_packed zeroing
        return h

    h_ref[...] = lax.fori_loop(0, tile_t, step, h_ref[...], unroll=unroll)


def gru_bwd_merge_kernel(len_ref, x_ref, fwd_ref, wih_hbm, whh_hbm, bi_hbm, bhn_hbm,
                         out_ref, h_ref, gir_ref, giz_ref, gin_ref, m_ref,
                         wih_v, whh_v, bi_v, bhn_v, sem, *, hidden, unroll):
    """Backward-direction GRU + (fwd+bwd)/2 merge + fused L2 norm over one time tile.

    The grid iterates time tiles in reverse (reversed index_map); inside the tile we
    walk t from tile_t-1 down to 0, so the recurrence sees time reversed.
    """
    tile_t, B, D = x_ref.shape
    H = hidden
    tile_base = (pl.num_programs(0) - 1 - pl.program_id(0)) * tile_t

    _tile_prologue(tile_base, len_ref, x_ref, wih_hbm, whh_hbm, bi_hbm, bhn_hbm,
                   h_ref, gir_ref, giz_ref, gin_ref, m_ref,
                   wih_v, whh_v, bi_v, bhn_v, sem, H)

    whh = whh_v[...]
    bhn = bhn_v[...]

    def step(j, h):
        t = tile_t - 1 - j
        valid = m_ref[t] > 0.0
        h_new = _gru_cell(h, gir_ref[t], giz_ref[t], gin_ref[t], whh, bhn, H)
        h = jnp.where(valid, h_new, h)
        bwd_t = jnp.where(valid, h, 0.0)

        # merge the two bi-GRU halves, then fused L2 norm: X / (sqrt(sum X^2) + 1e-8).
        # approx reciprocal runs on the EUP slot (~1e-3 rel. error, documented deviation);
        # fully-padded rows: merged == 0 so the product stays exactly 0.
        merged = (fwd_ref[t].astype(jnp.float32) + bwd_t) * 0.5
        ssq = jnp.sum(merged * merged, axis=-1, keepdims=True)
        inv_norm = pl.reciprocal(jnp.sqrt(ssq) + 1e-8, approx=True)
        out_ref[t] = (merged * inv_norm).astype(out_ref.dtype)
        return h

    h_ref[...] = lax.fori_loop(0, tile_t, step, h_ref[...], unroll=unroll)


# ---------------------------------------------------------------------------
# VMEM budgeting (generation-aware)
# ---------------------------------------------------------------------------
def _physical_vmem_bytes():
    try:
        cap = int(pltpu.get_tpu_info().vmem_capacity_bytes)
        if cap > 0:
            return cap
    except Exception:
        pass
    return 64 << 20  # conservative fallback (v7x per-core physical VMEM)


def _vmem_limit_bytes(tile_t, B, D, H):
    bf16, f32 = 2, 4
    # Pallas double-buffers every streamed (blocked) input/output tile.
    streamed = tile_t * B * (D + 2 * H) * bf16 + B * 4        # x + fwd-half + out tiles + lengths
    buffered = 2 * streamed
    # Single-buffered persistent scratch: h, per-gate gi slabs, mask, weights, biases.
    scratch = ((B * H + 3 * tile_t * B * H + tile_t * B) * f32
               + (D + H) * 3 * H * bf16 + 4 * H * f32)
    est = int((buffered + scratch) * 1.3) + (8 << 20)         # compiler headroom
    cap = _physical_vmem_bytes() - (8 << 20)
    return max(min(est, cap), 32 << 20)


# ---------------------------------------------------------------------------
# Wrapper
# ---------------------------------------------------------------------------
def cap_bigru_forward(x_tokens, lengths, params, *, tile_t=8):
    """Full CapBiGRU forward. Returns (B, T, H) float32 caption embeddings."""
    # Embedding lookup + dropout (identity at eval) stay in plain JAX (glue).
    emb = params["embed"][x_tokens]                                # (B, T, D)
    B, T, D = emb.shape
    H = params["whh_f_T"].shape[0]

    tile_t = max(1, min(tile_t, T))
    num_t = -(-T // tile_t)
    T_pad = num_t * tile_t

    # Time-major bf16 operands for the MXU; gate math stays f32 in-kernel.
    x_tbd = jnp.transpose(emb, (1, 0, 2)).astype(jnp.bfloat16)     # (T, B, D)
    if T_pad != T:
        x_tbd = jnp.pad(x_tbd, ((0, T_pad - T), (0, 0), (0, 0)))
    len2d = lengths.astype(jnp.int32).reshape(B, 1)

    # Fold b_ih (all gates) + b_hh (r,z gates) into one bias added to the hoisted gi;
    # b_hn stays separate (it sits inside r*(W_hn h + b_hn)).
    def fold_biases(bih, bhh):
        bi = bih.at[:, :2 * H].add(bhh[:, :2 * H])
        return bi.astype(jnp.float32), bhh[:, 2 * H:].astype(jnp.float32)

    bi_f, bhn_f = fold_biases(params["bih_f"], params["bhh_f"])
    bi_b, bhn_b = fold_biases(params["bih_b"], params["bhh_b"])
    wih_f = params["wih_f_T"].astype(jnp.bfloat16)
    whh_f = params["whh_f_T"].astype(jnp.bfloat16)
    wih_b = params["wih_b_T"].astype(jnp.bfloat16)
    whh_b = params["whh_b_T"].astype(jnp.bfloat16)

    # Full unroll for short tiles; partial unroll keeps code size bounded for long ones.
    unroll = True if tile_t <= 8 else 4

    compiler_params = pltpu.CompilerParams(
        dimension_semantics=("arbitrary",),                        # serial recurrence over T tiles
        vmem_limit_bytes=_vmem_limit_bytes(tile_t, B, D, H),
    )

    fwd_idx = lambda i: (i, 0, 0)
    rev_idx = lambda i: (num_t - 1 - i, 0, 0)
    len_spec = pl.BlockSpec((B, 1), lambda i: (0, 0))
    any_spec = pl.BlockSpec(memory_space=pl.ANY)                   # weights stay in HBM, copied once

    def scratch_shapes():
        return [
            pltpu.VMEM((B, H), jnp.float32),               # persistent hidden state
            pltpu.VMEM((tile_t, B, H), jnp.float32),       # hoisted gi, reset gate
            pltpu.VMEM((tile_t, B, H), jnp.float32),       # hoisted gi, update gate
            pltpu.VMEM((tile_t, B, H), jnp.float32),       # hoisted gi, new gate
            pltpu.VMEM((tile_t, B, 1), jnp.float32),       # per-tile validity mask
            pltpu.VMEM((D, 3 * H), jnp.bfloat16),          # single-buffered W_ih
            pltpu.VMEM((H, 3 * H), jnp.bfloat16),          # single-buffered W_hh
            pltpu.VMEM((1, 3 * H), jnp.float32),           # folded bias (b_ih + b_hh[r,z])
            pltpu.VMEM((1, H), jnp.float32),               # b_hn
            pltpu.SemaphoreType.DMA(()),                   # weight-copy semaphore
        ]

    # ---- forward direction: stream time tiles 0 .. num_t-1 (bf16 output half) ----
    fwd_out = pl.pallas_call(
        functools.partial(gru_fwd_kernel, hidden=H, unroll=unroll),
        out_shape=jax.ShapeDtypeStruct((T_pad, B, H), jnp.bfloat16),
        grid=(num_t,),
        in_specs=[len_spec,
                  pl.BlockSpec((tile_t, B, D), fwd_idx),
                  any_spec, any_spec, any_spec, any_spec],
        out_specs=pl.BlockSpec((tile_t, B, H), fwd_idx),
        scratch_shapes=scratch_shapes(),
        compiler_params=compiler_params,
    )(len2d, x_tbd, wih_f, whh_f, bi_f, bhn_f)

    # ---- backward direction + merge + L2 norm: stream time tiles in reverse ----
    out_tbh = pl.pallas_call(
        functools.partial(gru_bwd_merge_kernel, hidden=H, unroll=unroll),
        out_shape=jax.ShapeDtypeStruct((T_pad, B, H), jnp.float32),
        grid=(num_t,),
        in_specs=[len_spec,
                  pl.BlockSpec((tile_t, B, D), rev_idx),
                  pl.BlockSpec((tile_t, B, H), rev_idx),   # forward half (bf16)
                  any_spec, any_spec, any_spec, any_spec],
        out_specs=pl.BlockSpec((tile_t, B, H), rev_idx),
        scratch_shapes=scratch_shapes(),
        compiler_params=compiler_params,
    )(len2d, x_tbd, fwd_out, wih_b, whh_b, bi_b, bhn_b)

    # back to batch-first (B, T, H). Positions t >= length are exactly zero
    # (pad_packed_sequence semantics; PyTorch would concat uninitialized memory
    # when max(lengths) < T — we keep zeros instead).
    return jnp.transpose(out_tbh[:T], (1, 0, 2))


# ---------------------------------------------------------------------------
# Params / demo
# ---------------------------------------------------------------------------
def init_params(key, vocab_size, word_dim, hidden):
    """Deterministic synthetic init mirroring nn.Embedding / nn.GRU shapes."""
    ks = jax.random.split(key, 9)
    bound = 1.0 / float(hidden) ** 0.5

    def u(k_, shape, lo, hi):
        return jax.random.uniform(k_, shape, jnp.float32, lo, hi)

    embed = u(ks[0], (vocab_size, word_dim), -0.1, 0.1)

    wih_f = u(ks[1], (3 * hidden, word_dim), -bound, bound)
    whh_f = u(ks[2], (3 * hidden, hidden), -bound, bound)
    bih_f = u(ks[3], (3 * hidden,), -bound, bound)
    bhh_f = u(ks[4], (3 * hidden,), -bound, bound)
    wih_b = u(ks[5], (3 * hidden, word_dim), -bound, bound)
    whh_b = u(ks[6], (3 * hidden, hidden), -bound, bound)
    bih_b = u(ks[7], (3 * hidden,), -bound, bound)
    bhh_b = u(ks[8], (3 * hidden,), -bound, bound)

    return dict(
        embed=embed,
        wih_f_T=wih_f.T, whh_f_T=whh_f.T,
        bih_f=bih_f.reshape(1, -1), bhh_f=bhh_f.reshape(1, -1),
        wih_b_T=wih_b.T, whh_b_T=whh_b.T,
        bih_b=bih_b.reshape(1, -1), bhh_b=bhh_b.reshape(1, -1),
    )


if __name__ == "__main__":
    # Small shapes consistent with the module (scaled down from word_dim=300, emb_dim=1024).
    VOCAB, WORD_DIM, HIDDEN = 50, 32, 32
    B, T = 4, 8

    key = jax.random.PRNGKey(0)
    k_param, k_tok = jax.random.split(key)

    params = init_params(k_param, VOCAB, WORD_DIM, HIDDEN)
    x_tokens = jax.random.randint(k_tok, (B, T), 0, VOCAB, dtype=jnp.int32)
    lengths = jnp.array([8, 5, 3, 6], dtype=jnp.int32)

    cap_emb = cap_bigru_forward(x_tokens, lengths, params, tile_t=8)
    cap_emb = jax.block_until_ready(cap_emb)

    assert cap_emb.shape == (B, T, HIDDEN)
    assert bool(jnp.all(jnp.isfinite(cap_emb)))
    print("KERNEL_OK")
</pallas_src>

<mosaic_0001>
module attributes {stable_mosaic.version = 11 : i64} {
  func.func @gru_fwd_kernel(%arg0: i32, %arg1: memref<4x1xi32, #tpu.memory_space<vmem>>, %arg2: memref<8x4x32xbf16, #tpu.memory_space<vmem>>, %arg3: memref<32x96xbf16, #tpu.memory_space<any>>, %arg4: memref<32x96xbf16, #tpu.memory_space<any>>, %arg5: memref<1x96xf32, #tpu.memory_space<any>>, %arg6: memref<1x32xf32, #tpu.memory_space<any>>, %arg7: memref<8x4x32xbf16, #tpu.memory_space<vmem>>, %arg8: memref<4x32xf32, #tpu.memory_space<vmem>>, %arg9: memref<8x4x32xf32, #tpu.memory_space<vmem>>, %arg10: memref<8x4x32xf32, #tpu.memory_space<vmem>>, %arg11: memref<8x4x32xf32, #tpu.memory_space<vmem>>, %arg12: memref<8x4x1xf32, #tpu.memory_space<vmem>>, %arg13: memref<32x96xbf16, #tpu.memory_space<vmem>>, %arg14: memref<32x96xbf16, #tpu.memory_space<vmem>>, %arg15: memref<1x96xf32, #tpu.memory_space<vmem>>, %arg16: memref<1x32xf32, #tpu.memory_space<vmem>>, %arg17: memref<!tpu.dma_semaphore, #tpu.memory_space<semaphore_mem>>) attributes {dimension_semantics = [#tpu.dimension_semantics<arbitrary>], iteration_bounds = array<i64: 1>, scalar_prefetch = 0 : i64, scratch_operands = 10 : i64, tpu.core_type = #tpu.core_type<tc>, window_params = [{pipeline_mode = #tpu.pipeline_mode<synchronous>, transform_indices = @transform_0, window_bounds = array<i64: 4, 1>}, {transform_indices = @transform_1, window_bounds = array<i64: 8, 4, 32>}, {}, {}, {}, {}, {transform_indices = @transform_6, window_bounds = array<i64: 8, 4, 32>}]} {
    %c8_i32 = arith.constant 8 : i32
    %0 = arith.muli %arg0, %c8_i32 : i32
    %c0_i32 = arith.constant 0 : i32
    %1 = arith.cmpi eq, %arg0, %c0_i32 : i32
    %2 = arith.extui %1 : i1 to i32
    %c0_i32_0 = arith.constant 0 : i32
    %3 = arith.cmpi ne, %2, %c0_i32_0 : i32
    scf.if %3 {
      %cst_159 = arith.constant 0.000000e+00 : f32
      %456 = vector.broadcast %cst_159 : f32 to vector<4x32xf32>
      %c0_160 = arith.constant 0 : index
      %c0_161 = arith.constant 0 : index
      %457 = vector.load %arg8[%c0_160, %c0_161] : memref<4x32xf32, #tpu.memory_space<vmem>>, vector<4x32xf32>
      tpu.vector_store %arg8[%c0_160, %c0_161], %456 {strides = array<i32>} : memref<4x32xf32, #tpu.memory_space<vmem>>, vector<4x32xf32>,
      tpu.enqueue_dma source(%arg3 : memref<32x96xbf16, #tpu.memory_space<any>>) target(%arg13 : memref<32x96xbf16, #tpu.memory_space<vmem>>) target_semaphore(%arg17 : memref<!tpu.dma_semaphore, #tpu.memory_space<semaphore_mem>>)
      tpu.wait_dma2 semaphore(%arg17 : memref<!tpu.dma_semaphore, #tpu.memory_space<semaphore_mem>>) src(%arg3 : memref<32x96xbf16, #tpu.memory_space<any>>) dst(%arg13 : memref<32x96xbf16, #tpu.memory_space<vmem>>)
      tpu.enqueue_dma source(%arg4 : memref<32x96xbf16, #tpu.memory_space<any>>) target(%arg14 : memref<32x96xbf16, #tpu.memory_space<vmem>>) target_semaphore(%arg17 : memref<!tpu.dma_semaphore, #tpu.memory_space<semaphore_mem>>)
      tpu.wait_dma2 semaphore(%arg17 : memref<!tpu.dma_semaphore, #tpu.memory_space<semaphore_mem>>) src(%arg4 : memref<32x96xbf16, #tpu.memory_space<any>>) dst(%arg14 : memref<32x96xbf16, #tpu.memory_space<vmem>>)
      tpu.enqueue_dma source(%arg5 : memref<1x96xf32, #tpu.memory_space<any>>) target(%arg15 : memref<1x96xf32, #tpu.memory_space<vmem>>) target_semaphore(%arg17 : memref<!tpu.dma_semaphore, #tpu.memory_space<semaphore_mem>>)
      tpu.wait_dma2 semaphore(%arg17 : memref<!tpu.dma_semaphore, #tpu.memory_space<semaphore_mem>>) src(%arg5 : memref<1x96xf32, #tpu.memory_space<any>>) dst(%arg15 : memref<1x96xf32, #tpu.memory_space<vmem>>)
      tpu.enqueue_dma source(%arg6 : memref<1x32xf32, #tpu.memory_space<any>>) target(%arg16 : memref<1x32xf32, #tpu.memory_space<vmem>>) target_semaphore(%arg17 : memref<!tpu.dma_semaphore, #tpu.memory_space<semaphore_mem>>)
      tpu.wait_dma2 semaphore(%arg17 : memref<!tpu.dma_semaphore, #tpu.memory_space<semaphore_mem>>) src(%arg6 : memref<1x32xf32, #tpu.memory_space<any>>) dst(%arg16 : memref<1x32xf32, #tpu.memory_space<vmem>>)
    } else {
    }
    %4 = tpu.iota {dimensions = array<i32: 0>} : vector<8x4x1xi32>
    %5 = vector.broadcast %0 : i32 to vector<8x4x1xi32>
    %6 = arith.addi %4, %5 : vector<8x4x1xi32>
    %c0 = arith.constant 0 : index
    %c0_1 = arith.constant 0 : index
    %7 = vector.load %arg1[%c0, %c0_1] : memref<4x1xi32, #tpu.memory_space<vmem>>, vector<4x1xi32>
    %8 = vector.shape_cast %7 : vector<4x1xi32> to vector<1x4x1xi32>
    %9 = vector.broadcast %8 : vector<1x4x1xi32> to vector<8x4x1xi32>
    %10 = arith.cmpi slt, %6, %9 : vector<8x4x1xi32>
    %11 = arith.extui %10 : vector<8x4x1xi1> to vector<8x4x1xi32>
    %12 = arith.sitofp %11 : vector<8x4x1xi32> to vector<8x4x1xf32>
    %c0_2 = arith.constant 0 : index
    %c0_3 = arith.constant 0 : index
    %c0_4 = arith.constant 0 : index
    %13 = vector.load %arg12[%c0_2, %c0_3, %c0_4] : memref<8x4x1xf32, #tpu.memory_space<vmem>>, vector<8x4x1xf32>
    tpu.vector_store %arg12[%c0_2, %c0_3, %c0_4], %12 {strides = array<i32>} : memref<8x4x1xf32, #tpu.memory_space<vmem>>, vector<8x4x1xf32>,
    %c0_5 = arith.constant 0 : index
    %c0_6 = arith.constant 0 : index
    %c0_7 = arith.constant 0 : index
    %14 = vector.load %arg2[%c0_5, %c0_6, %c0_7] : memref<8x4x32xbf16, #tpu.memory_space<vmem>>, vector<8x4x32xbf16>
    %15 = vector.shape_cast %14 : vector<8x4x32xbf16> to vector<32x32xbf16>
    %c0_8 = arith.constant 0 : index
    %c0_9 = arith.constant 0 : index
    %16 = vector.load %arg13[%c0_8, %c0_9] : memref<32x96xbf16, #tpu.memory_space<vmem>>, vector<32x96xbf16>
    %cst = arith.constant dense<0.000000e+00> : vector<32x96xf32>
    %17 = tpu.matmul %15, %16, %cst {dimension_numbers = #tpu.dot_dimension_numbers<[1], [0], [0], [1], [0, 0, 1, 1], [], []>} : vector<32x32xbf16>, vector<32x96xbf16>, vector<32x96xf32> -> vector<32x96xf32>
    %c0_10 = arith.constant 0 : index
    %c0_11 = arith.constant 0 : index
    %18 = vector.load %arg15[%c0_10, %c0_11] : memref<1x96xf32, #tpu.memory_space<vmem>>, vector<1x96xf32>
    %19 = vector.broadcast %18 : vector<1x96xf32> to vector<32x96xf32>
    %20 = arith.addf %17, %19 : vector<32x96xf32>
    %21 = vector.shape_cast %20 : vector<32x96xf32> to vector<8x4x96xf32>
    %22 = vector.extract_strided_slice %21 {offsets = [0, 0, 0], sizes = [8, 4, 32], strides = [1, 1, 1]} : vector<8x4x96xf32> to vector<8x4x32xf32>
    %c0_12 = arith.constant 0 : index
    %c0_13 = arith.constant 0 : index
    %c0_14 = arith.constant 0 : index
    %23 = vector.load %arg9[%c0_12, %c0_13, %c0_14] : memref<8x4x32xf32, #tpu.memory_space<vmem>>, vector<8x4x32xf32>
    tpu.vector_store %arg9[%c0_12, %c0_13, %c0_14], %22 {strides = array<i32>} : memref<8x4x32xf32, #tpu.memory_space<vmem>>, vector<8x4x32xf32>,
    %24 = vector.extract_strided_slice %21 {offsets = [0, 0, 32], sizes = [8, 4, 32], strides = [1, 1, 1]} : vector<8x4x96xf32> to vector<8x4x32xf32>
    %c0_15 = arith.constant 0 : index
    %c0_16 = arith.constant 0 : index
    %c0_17 = arith.constant 0 : index
    %25 = vector.load %arg10[%c0_15, %c0_16, %c0_17] : memref<8x4x32xf32, #tpu.memory_space<vmem>>, vector<8x4x32xf32>
    tpu.vector_store %arg10[%c0_15, %c0_16, %c0_17], %24 {strides = array<i32>} : memref<8x4x32xf32, #tpu.memory_space<vmem>>, vector<8x4x32xf32>,
    %26 = vector.extract_strided_slice %21 {offsets = [0, 0, 64], sizes = [8, 4, 32], strides = [1, 1, 1]} : vector<8x4x96xf32> to vector<8x4x32xf32>
    %c0_18 = arith.constant 0 : index
    %c0_19 = arith.constant 0 : index
    %c0_20 = arith.constant 0 : index
    %27 = vector.load %arg11[%c0_18, %c0_19, %c0_20] : memref<8x4x32xf32, #tpu.memory_space<vmem>>, vector<8x4x32xf32>
    tpu.vector_store %arg11[%c0_18, %c0_19, %c0_20], %26 {strides = array<i32>} : memref<8x4x32xf32, #tpu.memory_space<vmem>>, vector<8x4x32xf32>,
    %c0_21 = arith.constant 0 : index
    %c0_22 = arith.constant 0 : index
    %28 = vector.load %arg14[%c0_21, %c0_22] : memref<32x96xbf16, #tpu.memory_space<vmem>>, vector<32x96xbf16>
    %c0_23 = arith.constant 0 : index
    %c0_24 = arith.constant 0 : index
    %29 = vector.load %arg16[%c0_23, %c0_24] : memref<1x32xf32, #tpu.memory_space<vmem>>, vector<1x32xf32>
    %c0_25 = arith.constant 0 : index
    %c0_26 = arith.constant 0 : index
    %30 = vector.load %arg8[%c0_25, %c0_26] : memref<4x32xf32, #tpu.memory_space<vmem>>, vector<4x32xf32>
    %c0_i32_27 = arith.constant 0 : i32
    %31 = arith.index_cast %c0_i32_27 : i32 to index
    %c0_28 = arith.constant 0 : index
    %c0_29 = arith.constant 0 : index
    %32 = vector.load %arg12[%31, %c0_28, %c0_29] : memref<8x4x1xf32, #tpu.memory_space<vmem>>, vector<1x4x1xf32>
    %33 = vector.shape_cast %32 : vector<1x4x1xf32> to vector<4x1xf32>
    %cst_30 = arith.constant 0.000000e+00 : f32
    %34 = vector.broadcast %cst_30 : f32 to vector<4x1xf32>
    %35 = arith.cmpf ogt, %33, %34 : vector<4x1xf32>
    %36 = arith.index_cast %c0_i32_27 : i32 to index
    %c0_31 = arith.constant 0 : index
    %c0_32 = arith.constant 0 : index
    %37 = vector.load %arg9[%36, %c0_31, %c0_32] : memref<8x4x32xf32, #tpu.memory_space<vmem>>, vector<1x4x32xf32>
    %38 = vector.shape_cast %37 : vector<1x4x32xf32> to vector<4x32xf32>
    %39 = arith.index_cast %c0_i32_27 : i32 to index
    %c0_33 = arith.constant 0 : index
    %c0_34 = arith.constant 0 : index
    %40 = vector.load %arg10[%39, %c0_33, %c0_34] : memref<8x4x32xf32, #tpu.memory_space<vmem>>, vector<1x4x32xf32>
    %41 = vector.shape_cast %40 : vector<1x4x32xf32> to vector<4x32xf32>
    %42 = arith.index_cast %c0_i32_27 : i32 to index
    %c0_35 = arith.constant 0 : index
    %c0_36 = arith.constant 0 : index
    %43 = vector.load %arg11[%42, %c0_35, %c0_36] : memref<8x4x32xf32, #tpu.memory_space<vmem>>, vector<1x4x32xf32>
    %44 = vector.shape_cast %43 : vector<1x4x32xf32> to vector<4x32xf32>
    %45 = arith.truncf %30 : vector<4x32xf32> to vector<4x32xbf16>
    %cst_37 = arith.constant dense<0.000000e+00> : vector<4x96xf32>
    %46 = tpu.matmul %45, %28, %cst_37 {dimension_numbers = #tpu.dot_dimension_numbers<[1], [0], [0], [1], [0, 0, 1, 1], [], []>} : vector<4x32xbf16>, vector<32x96xbf16>, vector<4x96xf32> -> vector<4x96xf32>
    %47 = vector.extract_strided_slice %46 {offsets = [0, 0], sizes = [4, 32], strides = [1, 1]} : vector<4x96xf32> to vector<4x32xf32>
    %48 = arith.addf %38, %47 : vector<4x32xf32>
    %49 = arith.negf %48 : vector<4x32xf32>
    %50 = math.exp %49 : vector<4x32xf32>
    %cst_38 = arith.constant 1.000000e+00 : f32
    %51 = vector.broadcast %cst_38 : f32 to vector<4x32xf32>
    %52 = arith.addf %51, %50 : vector<4x32xf32>
    %53 = arith.divf %51, %52 : vector<4x32xf32>
    %54 = vector.extract_strided_slice %46 {offsets = [0, 32], sizes = [4, 32], strides = [1, 1]} : vector<4x96xf32> to vector<4x32xf32>
    %55 = arith.addf %41, %54 : vector<4x32xf32>
    %56 = arith.negf %55 : vector<4x32xf32>
    %57 = math.exp %56 : vector<4x32xf32>
    %cst_39 = arith.constant 1.000000e+00 : f32
    %58 = vector.broadcast %cst_39 : f32 to vector<4x32xf32>
    %59 = arith.addf %58, %57 : vector<4x32xf32>
    %60 = arith.divf %58, %59 : vector<4x32xf32>
    %61 = vector.extract_strided_slice %46 {offsets = [0, 64], sizes = [4, 32], strides = [1, 1]} : vector<4x96xf32> to vector<4x32xf32>
    %62 = vector.broadcast %29 : vector<1x32xf32> to vector<4x32xf32>
    %63 = arith.addf %61, %62 : vector<4x32xf32>
    %64 = arith.mulf %53, %63 : vector<4x32xf32>
    %65 = arith.addf %44, %64 : vector<4x32xf32>
    %66 = math.tanh %65 : vector<4x32xf32>
    %cst_40 = arith.constant 1.000000e+00 : f32
    %67 = vector.broadcast %cst_40 : f32 to vector<4x32xf32>
    %68 = arith.subf %67, %60 : vector<4x32xf32>
    %69 = arith.mulf %68, %66 : vector<4x32xf32>
    %70 = arith.mulf %60, %30 : vector<4x32xf32>
    %71 = arith.addf %69, %70 : vector<4x32xf32>
    %72 = vector.shape_cast %35 : vector<4x1xi1> to vector<4x1xi1>
    %73 = vector.broadcast %72 : vector<4x1xi1> to vector<4x32xi1>
    %74 = arith.select %73, %71, %30 : vector<4x32xi1>, vector<4x32xf32>
    %cst_41 = arith.constant 0.000000e+00 : f32
    %75 = vector.shape_cast %35 : vector<4x1xi1> to vector<4x1xi1>
    %76 = vector.broadcast %75 : vector<4x1xi1> to vector<4x32xi1>
    %77 = vector.broadcast %cst_41 : f32 to vector<4x32xf32>
    %78 = arith.select %76, %74, %77 : vector<4x32xi1>, vector<4x32xf32>
    %79 = arith.truncf %78 : vector<4x32xf32> to vector<4x32xbf16>
    %80 = arith.index_cast %c0_i32_27 : i32 to index
    %c0_42 = arith.constant 0 : index
    %c0_43 = arith.constant 0 : index
    %81 = vector.load %arg7[%80, %c0_42, %c0_43] : memref<8x4x32xbf16, #tpu.memory_space<vmem>>, vector<1x4x32xbf16>
    %82 = vector.shape_cast %81 : vector<1x4x32xbf16> to vector<4x32xbf16>
    %83 = vector.shape_cast %79 : vector<4x32xbf16> to vector<1x4x32xbf16>
    tpu.vector_store %arg7[%80, %c0_42, %c0_43], %83 {strides = array<i32>} : memref<8x4x32xbf16, #tpu.memory_space<vmem>>, vector<1x4x32xbf16>,
    %c1_i32 = arith.constant 1 : i32
    %84 = arith.index_cast %c1_i32 : i32 to index
    %c0_44 = arith.constant 0 : index
    %c0_45 = arith.constant 0 : index
    %85 = vector.load %arg12[%84, %c0_44, %c0_45] : memref<8x4x1xf32, #tpu.memory_space<vmem>>, vector<1x4x1xf32>
    %86 = vector.shape_cast %85 : vector<1x4x1xf32> to vector<4x1xf32>
    %cst_46 = arith.constant 0.000000e+00 : f32
    %87 = vector.broadcast %cst_46 : f32 to vector<4x1xf32>
    %88 = arith.cmpf ogt, %86, %87 : vector<4x1xf32>
    %89 = arith.index_cast %c1_i32 : i32 to index
    %c0_47 = arith.constant 0 : index
    %c0_48 = arith.constant 0 : index
    %90 = vector.load %arg9[%89, %c0_47, %c0_48] : memref<8x4x32xf32, #tpu.memory_space<vmem>>, vector<1x4x32xf32>
    %91 = vector.shape_cast %90 : vector<1x4x32xf32> to vector<4x32xf32>
    %92 = arith.index_cast %c1_i32 : i32 to index
    %c0_49 = arith.constant 0 : index
    %c0_50 = arith.constant 0 : index
    %93 = vector.load %arg10[%92, %c0_49, %c0_50] : memref<8x4x32xf32, #tpu.memory_space<vmem>>, vector<1x4x32xf32>
    %94 = vector.shape_cast %93 : vector<1x4x32xf32> to vector<4x32xf32>
    %95 = arith.index_cast %c1_i32 : i32 to index
    %c0_51 = arith.constant 0 : index
    %c0_52 = arith.constant 0 : index
    %96 = vector.load %arg11[%95, %c0_51, %c0_52] : memref<8x4x32xf32, #tpu.memory_space<vmem>>, vector<1x4x32xf32>
    %97 = vector.shape_cast %96 : vector<1x4x32xf32> to vector<4x32xf32>
    %98 = arith.truncf %74 : vector<4x32xf32> to vector<4x32xbf16>
    %cst_53 = arith.constant dense<0.000000e+00> : vector<4x96xf32>
    %99 = tpu.matmul %98, %28, %cst_53 {dimension_numbers = #tpu.dot_dimension_numbers<[1], [0], [0], [1], [0, 0, 1, 1], [], []>} : vector<4x32xbf16>, vector<32x96xbf16>, vector<4x96xf32> -> vector<4x96xf32>
    %100 = vector.extract_strided_slice %99 {offsets = [0, 0], sizes = [4, 32], strides = [1, 1]} : vector<4x96xf32> to vector<4x32xf32>
    %101 = arith.addf %91, %100 : vector<4x32xf32>
    %102 = arith.negf %101 : vector<4x32xf32>
    %103 = math.exp %102 : vector<4x32xf32>
    %cst_54 = arith.constant 1.000000e+00 : f32
    %104 = vector.broadcast %cst_54 : f32 to vector<4x32xf32>
    %105 = arith.addf %104, %103 : vector<4x32xf32>
    %106 = arith.divf %104, %105 : vector<4x32xf32>
    %107 = vector.extract_strided_slice %99 {offsets = [0, 32], sizes = [4, 32], strides = [1, 1]} : vector<4x96xf32> to vector<4x32xf32>
    %108 = arith.addf %94, %107 : vector<4x32xf32>
    %109 = arith.negf %108 : vector<4x32xf32>
    %110 = math.exp %109 : vector<4x32xf32>
    %cst_55 = arith.constant 1.000000e+00 : f32
    %111 = vector.broadcast %cst_55 : f32 to vector<4x32xf32>
    %112 = arith.addf %111, %110 : vector<4x32xf32>
    %113 = arith.divf %111, %112 : vector<4x32xf32>
    %114 = vector.extract_strided_slice %99 {offsets = [0, 64], sizes = [4, 32], strides = [1, 1]} : vector<4x96xf32> to vector<4x32xf32>
    %115 = vector.broadcast %29 : vector<1x32xf32> to vector<4x32xf32>
    %116 = arith.addf %114, %115 : vector<4x32xf32>
    %117 = arith.mulf %106, %116 : vector<4x32xf32>
    %118 = arith.addf %97, %117 : vector<4x32xf32>
    %119 = math.tanh %118 : vector<4x32xf32>
    %cst_56 = arith.constant 1.000000e+00 : f32
    %120 = vector.broadcast %cst_56 : f32 to vector<4x32xf32>
    %121 = arith.subf %120, %113 : vector<4x32xf32>
    %122 = arith.mulf %121, %119 : vector<4x32xf32>
    %123 = arith.mulf %113, %74 : vector<4x32xf32>
    %124 = arith.addf %122, %123 : vector<4x32xf32>
    %125 = vector.shape_cast %88 : vector<4x1xi1> to vector<4x1xi1>
    %126 = vector.broadcast %125 : vector<4x1xi1> to vector<4x32xi1>
    %127 = arith.select %126, %124, %74 : vector<4x32xi1>, vector<4x32xf32>
    %cst_57 = arith.constant 0.000000e+00 : f32
    %128 = vector.shape_cast %88 : vector<4x1xi1> to vector<4x1xi1>
    %129 = vector.broadcast %128 : vector<4x1xi1> to vector<4x32xi1>
    %130 = vector.broadcast %cst_57 : f32 to vector<4x32xf32>
    %131 = arith.select %129, %127, %130 : vector<4x32xi1>, vector<4x32xf32>
    %132 = arith.truncf %131 : vector<4x32xf32> to vector<4x32xbf16>
    %133 = arith.index_cast %c1_i32 : i32 to index
    %c0_58 = arith.constant 0 : index
    %c0_59 = arith.constant 0 : index
    %134 = vector.load %arg7[%133, %c0_58, %c0_59] : memref<8x4x32xbf16, #tpu.memory_space<vmem>>, vector<1x4x32xbf16>
    %135 = vector.shape_cast %134 : vector<1x4x32xbf16> to vector<4x32xbf16>
    %136 = vector.shape_cast %132 : vector<4x32xbf16> to vector<1x4x32xbf16>
    tpu.vector_store %arg7[%133, %c0_58, %c0_59], %136 {strides = array<i32>} : memref<8x4x32xbf16, #tpu.memory_space<vmem>>, vector<1x4x32xbf16>,
    %c2_i32 = arith.constant 2 : i32
    %137 = arith.index_cast %c2_i32 : i32 to index
    %c0_60 = arith.constant 0 : index
    %c0_61 = arith.constant 0 : index
    %138 = vector.load %arg12[%137, %c0_60, %c0_61] : memref<8x4x1xf32, #tpu.memory_space<vmem>>, vector<1x4x1xf32>
    %139 = vector.shape_cast %138 : vector<1x4x1xf32> to vector<4x1xf32>
    %cst_62 = arith.constant 0.000000e+00 : f32
    %140 = vector.broadcast %cst_62 : f32 to vector<4x1xf32>
    %141 = arith.cmpf ogt, %139, %140 : vector<4x1xf32>
    %142 = arith.index_cast %c2_i32 : i32 to index
    %c0_63 = arith.constant 0 : index
    %c0_64 = arith.constant 0 : index
    %143 = vector.load %arg9[%142, %c0_63, %c0_64] : memref<8x4x32xf32, #tpu.memory_space<vmem>>, vector<1x4x32xf32>
    %144 = vector.shape_cast %143 : vector<1x4x32xf32> to vector<4x32xf32>
    %145 = arith.index_cast %c2_i32 : i32 to index
    %c0_65 = arith.constant 0 : index
    %c0_66 = arith.constant 0 : index
    %146 = vector.load %arg10[%145, %c0_65, %c0_66] : memref<8x4x32xf32, #tpu.memory_space<vmem>>, vector<1x4x32xf32>
    %147 = vector.shape_cast %146 : vector<1x4x32xf32> to vector<4x32xf32>
    %148 = arith.index_cast %c2_i32 : i32 to index
    %c0_67 = arith.constant 0 : index
    %c0_68 = arith.constant 0 : index
    %149 = vector.load %arg11[%148, %c0_67, %c0_68] : memref<8x4x32xf32, #tpu.memory_space<vmem>>, vector<1x4x32xf32>
    %150 = vector.shape_cast %149 : vector<1x4x32xf32> to vector<4x32xf32>
    %151 = arith.truncf %127 : vector<4x32xf32> to vector<4x32xbf16>
    %cst_69 = arith.constant dense<0.000000e+00> : vector<4x96xf32>
    %152 = tpu.matmul %151, %28, %cst_69 {dimension_numbers = #tpu.dot_dimension_numbers<[1], [0], [0], [1], [0, 0, 1, 1], [], []>} : vector<4x32xbf16>, vector<32x96xbf16>, vector<4x96xf32> -> vector<4x96xf32>
    %153 = vector.extract_strided_slice %152 {offsets = [0, 0], sizes = [4, 32], strides = [1, 1]} : vector<4x96xf32> to vector<4x32xf32>
    %154 = arith.addf %144, %153 : vector<4x32xf32>
    %155 = arith.negf %154 : vector<4x32xf32>
    %156 = math.exp %155 : vector<4x32xf32>
    %cst_70 = arith.constant 1.000000e+00 : f32
    %157 = vector.broadcast %cst_70 : f32 to vector<4x32xf32>
    %158 = arith.addf %157, %156 : vector<4x32xf32>
    %159 = arith.divf %157, %158 : vector<4x32xf32>
    %160 = vector.extract_strided_slice %152 {offsets = [0, 32], sizes = [4, 32], strides = [1, 1]} : vector<4x96xf32> to vector<4x32xf32>
    %161 = arith.addf %147, %160 : vector<4x32xf32>
    %162 = arith.negf %161 : vector<4x32xf32>
    %163 = math.exp %162 : vector<4x32xf32>
    %cst_71 = arith.constant 1.000000e+00 : f32
    %164 = vector.broadcast %cst_71 : f32 to vector<4x32xf32>
    %165 = arith.addf %164, %163 : vector<4x32xf32>
    %166 = arith.divf %164, %165 : vector<4x32xf32>
    %167 = vector.extract_strided_slice %152 {offsets = [0, 64], sizes = [4, 32], strides = [1, 1]} : vector<4x96xf32> to vector<4x32xf32>
    %168 = vector.broadcast %29 : vector<1x32xf32> to vector<4x32xf32>
    %169 = arith.addf %167, %168 : vector<4x32xf32>
    %170 = arith.mulf %159, %169 : vector<4x32xf32>
    %171 = arith.addf %150, %170 : vector<4x32xf32>
    %172 = math.tanh %171 : vector<4x32xf32>
    %cst_72 = arith.constant 1.000000e+00 : f32
    %173 = vector.broadcast %cst_72 : f32 to vector<4x32xf32>
    %174 = arith.subf %173, %166 : vector<4x32xf32>
    %175 = arith.mulf %174, %172 : vector<4x32xf32>
    %176 = arith.mulf %166, %127 : vector<4x32xf32>
    %177 = arith.addf %175, %176 : vector<4x32xf32>
    %178 = vector.shape_cast %141 : vector<4x1xi1> to vector<4x1xi1>
    %179 = vector.broadcast %178 : vector<4x1xi1> to vector<4x32xi1>
    %180 = arith.select %179, %177, %127 : vector<4x32xi1>, vector<4x32xf32>
    %cst_73 = arith.constant 0.000000e+00 : f32
    %181 = vector.shape_cast %141 : vector<4x1xi1> to vector<4x1xi1>
    %182 = vector.broadcast %181 : vector<4x1xi1> to vector<4x32xi1>
    %183 = vector.broadcast %cst_73 : f32 to vector<4x32xf32>
    %184 = arith.select %182, %180, %183 : vector<4x32xi1>, vector<4x32xf32>
    %185 = arith.truncf %184 : vector<4x32xf32> to vector<4x32xbf16>
    %186 = arith.index_cast %c2_i32 : i32 to index
    %c0_74 = arith.constant 0 : index
    %c0_75 = arith.constant 0 : index
    %187 = vector.load %arg7[%186, %c0_74, %c0_75] : memref<8x4x32xbf16, #tpu.memory_space<vmem>>, vector<1x4x32xbf16>
    %188 = vector.shape_cast %187 : vector<1x4x32xbf16> to vector<4x32xbf16>
    %189 = vector.shape_cast %185 : vector<4x32xbf16> to vector<1x4x32xbf16>
    tpu.vector_store %arg7[%186, %c0_74, %c0_75], %189 {strides = array<i32>} : memref<8x4x32xbf16, #tpu.memory_space<vmem>>, vector<1x4x32xbf16>,
    %c3_i32 = arith.constant 3 : i32
    %190 = arith.index_cast %c3_i32 : i32 to index
    %c0_76 = arith.constant 0 : index
    %c0_77 = arith.constant 0 : index
    %191 = vector.load %arg12[%190, %c0_76, %c0_77] : memref<8x4x1xf32, #tpu.memory_space<vmem>>, vector<1x4x1xf32>
    %192 = vector.shape_cast %191 : vector<1x4x1xf32> to vector<4x1xf32>
    %cst_78 = arith.constant 0.000000e+00 : f32
    %193 = vector.broadcast %cst_78 : f32 to vector<4x1xf32>
    %194 = arith.cmpf ogt, %192, %193 : vector<4x1xf32>
    %195 = arith.index_cast %c3_i32 : i32 to index
    %c0_79 = arith.constant 0 : index
    %c0_80 = arith.constant 0 : index
    %196 = vector.load %arg9[%195, %c0_79, %c0_80] : memref<8x4x32xf32, #tpu.memory_space<vmem>>, vector<1x4x32xf32>
    %197 = vector.shape_cast %196 : vector<1x4x32xf32> to vector<4x32xf32>
    %198 = arith.index_cast %c3_i32 : i32 to index
    %c0_81 = arith.constant 0 : index
    %c0_82 = arith.constant 0 : index
    %199 = vector.load %arg10[%198, %c0_81, %c0_82] : memref<8x4x32xf32, #tpu.memory_space<vmem>>, vector<1x4x32xf32>
    %200 = vector.shape_cast %199 : vector<1x4x32xf32> to vector<4x32xf32>
    %201 = arith.index_cast %c3_i32 : i32 to index
    %c0_83 = arith.constant 0 : index
    %c0_84 = arith.constant 0 : index
    %202 = vector.load %arg11[%201, %c0_83, %c0_84] : memref<8x4x32xf32, #tpu.memory_space<vmem>>, vector<1x4x32xf32>
    %203 = vector.shape_cast %202 : vector<1x4x32xf32> to vector<4x32xf32>
    %204 = arith.truncf %180 : vector<4x32xf32> to vector<4x32xbf16>
    %cst_85 = arith.constant dense<0.000000e+00> : vector<4x96xf32>
    %205 = tpu.matmul %204, %28, %cst_85 {dimension_numbers = #tpu.dot_dimension_numbers<[1], [0], [0], [1], [0, 0, 1, 1], [], []>} : vector<4x32xbf16>, vector<32x96xbf16>, vector<4x96xf32> -> vector<4x96xf32>
    %206 = vector.extract_strided_slice %205 {offsets = [0, 0], sizes = [4, 32], strides = [1, 1]} : vector<4x96xf32> to vector<4x32xf32>
    %207 = arith.addf %197, %206 : vector<4x32xf32>
    %208 = arith.negf %207 : vector<4x32xf32>
    %209 = math.exp %208 : vector<4x32xf32>
    %cst_86 = arith.constant 1.000000e+00 : f32
    %210 = vector.broadcast %cst_86 : f32 to vector<4x32xf32>
    %211 = arith.addf %210, %209 : vector<4x32xf32>
    %212 = arith.divf %210, %211 : vector<4x32xf32>
    %213 = vector.extract_strided_slice %205 {offsets = [0, 32], sizes = [4, 32], strides = [1, 1]} : vector<4x96xf32> to vector<4x32xf32>
    %214 = arith.addf %200, %213 : vector<4x32xf32>
    %215 = arith.negf %214 : vector<4x32xf32>
    %216 = math.exp %215 : vector<4x32xf32>
    %cst_87 = arith.constant 1.000000e+00 : f32
    %217 = vector.broadcast %cst_87 : f32 to vector<4x32xf32>
    %218 = arith.addf %217, %216 : vector<4x32xf32>
    %219 = arith.divf %217, %218 : vector<4x32xf32>
    %220 = vector.extract_strided_slice %205 {offsets = [0, 64], sizes = [4, 32], strides = [1, 1]} : vector<4x96xf32> to vector<4x32xf32>
    %221 = vector.broadcast %29 : vector<1x32xf32> to vector<4x32xf32>
    %222 = arith.addf %220, %221 : vector<4x32xf32>
    %223 = arith.mulf %212, %222 : vector<4x32xf32>
    %224 = arith.addf %203, %223 : vector<4x32xf32>
    %225 = math.tanh %224 : vector<4x32xf32>
    %cst_88 = arith.constant 1.000000e+00 : f32
    %226 = vector.broadcast %cst_88 : f32 to vector<4x32xf32>
    %227 = arith.subf %226, %219 : vector<4x32xf32>
    %228 = arith.mulf %227, %225 : vector<4x32xf32>
    %229 = arith.mulf %219, %180 : vector<4x32xf32>
    %230 = arith.addf %228, %229 : vector<4x32xf32>
    %231 = vector.shape_cast %194 : vector<4x1xi1> to vector<4x1xi1>
    %232 = vector.broadcast %231 : vector<4x1xi1> to vector<4x32xi1>
    %233 = arith.select %232, %230, %180 : vector<4x32xi1>, vector<4x32xf32>
    %cst_89 = arith.constant 0.000000e+00 : f32
    %234 = vector.shape_cast %194 : vector<4x1xi1> to vector<4x1xi1>
    %235 = vector.broadcast %234 : vector<4x1xi1> to vector<4x32xi1>
    %236 = vector.broadcast %cst_89 : f32 to vector<4x32xf32>
    %237 = arith.select %235, %233, %236 : vector<4x32xi1>, vector<4x32xf32>
    %238 = arith.truncf %237 : vector<4x32xf32> to vector<4x32xbf16>
    %239 = arith.index_cast %c3_i32 : i32 to index
    %c0_90 = arith.constant 0 : index
    %c0_91 = arith.constant 0 : index
    %240 = vector.load %arg7[%239, %c0_90, %c0_91] : memref<8x4x32xbf16, #tpu.memory_space<vmem>>, vector<1x4x32xbf16>
    %241 = vector.shape_cast %240 : vector<1x4x32xbf16> to vector<4x32xbf16>
    %242 = vector.shape_cast %238 : vector<4x32xbf16> to vector<1x4x32xbf16>
    tpu.vector_store %arg7[%239, %c0_90, %c0_91], %242 {strides = array<i32>} : memref<8x4x32xbf16, #tpu.memory_space<vmem>>, vector<1x4x32xbf16>,
    %c4_i32 = arith.constant 4 : i32
    %243 = arith.index_cast %c4_i32 : i32 to index
    %c0_92 = arith.constant 0 : index
    %c0_93 = arith.constant 0 : index
    %244 = vector.load %arg12[%243, %c0_92, %c0_93] : memref<8x4x1xf32, #tpu.memory_space<vmem>>, vector<1x4x1xf32>
    %245 = vector.shape_cast %244 : vector<1x4x1xf32> to vector<4x1xf32>
    %cst_94 = arith.constant 0.000000e+00 : f32
    %246 = vector.broadcast %cst_94 : f32 to vector<4x1xf32>
    %247 = arith.cmpf ogt, %245, %246 : vector<4x1xf32>
    %248 = arith.index_cast %c4_i32 : i32 to index
    %c0_95 = arith.constant 0 : index
    %c0_96 = arith.constant 0 : index
    %249 = vector.load %arg9[%248, %c0_95, %c0_96] : memref<8x4x32xf32, #tpu.memory_space<vmem>>, vector<1x4x32xf32>
    %250 = vector.shape_cast %249 : vector<1x4x32xf32> to vector<4x32xf32>
    %251 = arith.index_cast %c4_i32 : i32 to index
    %c0_97 = arith.constant 0 : index
    %c0_98 = arith.constant 0 : index
    %252 = vector.load %arg10[%251, %c0_97, %c0_98] : memref<8x4x32xf32, #tpu.memory_space<vmem>>, vector<1x4x32xf32>
    %253 = vector.shape_cast %252 : vector<1x4x32xf32> to vector<4x32xf32>
    %254 = arith.index_cast %c4_i32 : i32 to index
    %c0_99 = arith.constant 0 : index
    %c0_100 = arith.constant 0 : index
    %255 = vector.load %arg11[%254, %c0_99, %c0_100] : memref<8x4x32xf32, #tpu.memory_space<vmem>>, vector<1x4x32xf32>
    %256 = vector.shape_cast %255 : vector<1x4x32xf32> to vector<4x32xf32>
    %257 = arith.truncf %233 : vector<4x32xf32> to vector<4x32xbf16>
    %cst_101 = arith.constant dense<0.000000e+00> : vector<4x96xf32>
    %258 = tpu.matmul %257, %28, %cst_101 {dimension_numbers = #tpu.dot_dimension_numbers<[1], [0], [0], [1], [0, 0, 1, 1], [], []>} : vector<4x32xbf16>, vector<32x96xbf16>, vector<4x96xf32> -> vector<4x96xf32>
    %259 = vector.extract_strided_slice %258 {offsets = [0, 0], sizes = [4, 32], strides = [1, 1]} : vector<4x96xf32> to vector<4x32xf32>
    %260 = arith.addf %250, %259 : vector<4x32xf32>
    %261 = arith.negf %260 : vector<4x32xf32>
    %262 = math.exp %261 : vector<4x32xf32>
    %cst_102 = arith.constant 1.000000e+00 : f32
    %263 = vector.broadcast %cst_102 : f32 to vector<4x32xf32>
    %264 = arith.addf %263, %262 : vector<4x32xf32>
    %265 = arith.divf %263, %264 : vector<4x32xf32>
    %266 = vector.extract_strided_slice %258 {offsets = [0, 32], sizes = [4, 32], strides = [1, 1]} : vector<4x96xf32> to vector<4x32xf32>
    %267 = arith.addf %253, %266 : vector<4x32xf32>
    %268 = arith.negf %267 : vector<4x32xf32>
    %269 = math.exp %268 : vector<4x32xf32>
    %cst_103 = arith.constant 1.000000e+00 : f32
    %270 = vector.broadcast %cst_103 : f32 to vector<4x32xf32>
    %271 = arith.addf %270, %269 : vector<4x32xf32>
    %272 = arith.divf %270, %271 : vector<4x32xf32>
    %273 = vector.extract_strided_slice %258 {offsets = [0, 64], sizes = [4, 32], strides = [1, 1]} : vector<4x96xf32> to vector<4x32xf32>
    %274 = vector.broadcast %29 : vector<1x32xf32> to vector<4x32xf32>
    %275 = arith.addf %273, %274 : vector<4x32xf32>
    %276 = arith.mulf %265, %275 : vector<4x32xf32>
    %277 = arith.addf %256, %276 : vector<4x32xf32>
    %278 = math.tanh %277 : vector<4x32xf32>
    %cst_104 = arith.constant 1.000000e+00 : f32
    %279 = vector.broadcast %cst_104 : f32 to vector<4x32xf32>
    %280 = arith.subf %279, %272 : vector<4x32xf32>
    %281 = arith.mulf %280, %278 : vector<4x32xf32>
    %282 = arith.mulf %272, %233 : vector<4x32xf32>
    %283 = arith.addf %281, %282 : vector<4x32xf32>
    %284 = vector.shape_cast %247 : vector<4x1xi1> to vector<4x1xi1>
    %285 = vector.broadcast %284 : vector<4x1xi1> to vector<4x32xi1>
    %286 = arith.select %285, %283, %233 : vector<4x32xi1>, vector<4x32xf32>
    %cst_105 = arith.constant 0.000000e+00 : f32
    %287 = vector.shape_cast %247 : vector<4x1xi1> to vector<4x1xi1>
    %288 = vector.broadcast %287 : vector<4x1xi1> to vector<4x32xi1>
    %289 = vector.broadcast %cst_105 : f32 to vector<4x32xf32>
    %290 = arith.select %288, %286, %289 : vector<4x32xi1>, vector<4x32xf32>
    %291 = arith.truncf %290 : vector<4x32xf32> to vector<4x32xbf16>
    %292 = arith.index_cast %c4_i32 : i32 to index
    %c0_106 = arith.constant 0 : index
    %c0_107 = arith.constant 0 : index
    %293 = vector.load %arg7[%292, %c0_106, %c0_107] : memref<8x4x32xbf16, #tpu.memory_space<vmem>>, vector<1x4x32xbf16>
    %294 = vector.shape_cast %293 : vector<1x4x32xbf16> to vector<4x32xbf16>
    %295 = vector.shape_cast %291 : vector<4x32xbf16> to vector<1x4x32xbf16>
    tpu.vector_store %arg7[%292, %c0_106, %c0_107], %295 {strides = array<i32>} : memref<8x4x32xbf16, #tpu.memory_space<vmem>>, vector<1x4x32xbf16>,
    %c5_i32 = arith.constant 5 : i32
    %296 = arith.index_cast %c5_i32 : i32 to index
    %c0_108 = arith.constant 0 : index
    %c0_109 = arith.constant 0 : index
    %297 = vector.load %arg12[%296, %c0_108, %c0_109] : memref<8x4x1xf32, #tpu.memory_space<vmem>>, vector<1x4x1xf32>
    %298 = vector.shape_cast %297 : vector<1x4x1xf32> to vector<4x1xf32>
    %cst_110 = arith.constant 0.000000e+00 : f32
    %299 = vector.broadcast %cst_110 : f32 to vector<4x1xf32>
    %300 = arith.cmpf ogt, %298, %299 : vector<4x1xf32>
    %301 = arith.index_cast %c5_i32 : i32 to index
    %c0_111 = arith.constant 0 : index
    %c0_112 = arith.constant 0 : index
    %302 = vector.load %arg9[%301, %c0_111, %c0_112] : memref<8x4x32xf32, #tpu.memory_space<vmem>>, vector<1x4x32xf32>
    %303 = vector.shape_cast %302 : vector<1x4x32xf32> to vector<4x32xf32>
    %304 = arith.index_cast %c5_i32 : i32 to index
    %c0_113 = arith.constant 0 : index
    %c0_114 = arith.constant 0 : index
    %305 = vector.load %arg10[%304, %c0_113, %c0_114] : memref<8x4x32xf32, #tpu.memory_space<vmem>>, vector<1x4x32xf32>
    %306 = vector.shape_cast %305 : vector<1x4x32xf32> to vector<4x32xf32>
    %307 = arith.index_cast %c5_i32 : i32 to index
    %c0_115 = arith.constant 0 : index
    %c0_116 = arith.constant 0 : index
    %308 = vector.load %arg11[%307, %c0_115, %c0_116] : memref<8x4x32xf32, #tpu.memory_space<vmem>>, vector<1x4x32xf32>
    %309 = vector.shape_cast %308 : vector<1x4x32xf32> to vector<4x32xf32>
    %310 = arith.truncf %286 : vector<4x32xf32> to vector<4x32xbf16>
    %cst_117 = arith.constant dense<0.000000e+00> : vector<4x96xf32>
    %311 = tpu.matmul %310, %28, %cst_117 {dimension_numbers = #tpu.dot_dimension_numbers<[1], [0], [0], [1], [0, 0, 1, 1], [], []>} : vector<4x32xbf16>, vector<32x96xbf16>, vector<4x96xf32> -> vector<4x96xf32>
    %312 = vector.extract_strided_slice %311 {offsets = [0, 0], sizes = [4, 32], strides = [1, 1]} : vector<4x96xf32> to vector<4x32xf32>
    %313 = arith.addf %303, %312 : vector<4x32xf32>
    %314 = arith.negf %313 : vector<4x32xf32>
    %315 = math.exp %314 : vector<4x32xf32>
    %cst_118 = arith.constant 1.000000e+00 : f32
    %316 = vector.broadcast %cst_118 : f32 to vector<4x32xf32>
    %317 = arith.addf %316, %315 : vector<4x32xf32>
    %318 = arith.divf %316, %317 : vector<4x32xf32>
    %319 = vector.extract_strided_slice %311 {offsets = [0, 32], sizes = [4, 32], strides = [1, 1]} : vector<4x96xf32> to vector<4x32xf32>
    %320 = arith.addf %306, %319 : vector<4x32xf32>
    %321 = arith.negf %320 : vector<4x32xf32>
    %322 = math.exp %321 : vector<4x32xf32>
    %cst_119 = arith.constant 1.000000e+00 : f32
    %323 = vector.broadcast %cst_119 : f32 to vector<4x32xf32>
    %324 = arith.addf %323, %322 : vector<4x32xf32>
    %325 = arith.divf %323, %324 : vector<4x32xf32>
    %326 = vector.extract_strided_slice %311 {offsets = [0, 64], sizes = [4, 32], strides = [1, 1]} : vector<4x96xf32> to vector<4x32xf32>
    %327 = vector.broadcast %29 : vector<1x32xf32> to vector<4x32xf32>
    %328 = arith.addf %326, %327 : vector<4x32xf32>
    %329 = arith.mulf %318, %328 : vector<4x32xf32>
    %330 = arith.addf %309, %329 : vector<4x32xf32>
    %331 = math.tanh %330 : vector<4x32xf32>
    %cst_120 = arith.constant 1.000000e+00 : f32
    %332 = vector.broadcast %cst_120 : f32 to vector<4x32xf32>
    %333 = arith.subf %332, %325 : vector<4x32xf32>
    %334 = arith.mulf %333, %331 : vector<4x32xf32>
    %335 = arith.mulf %325, %286 : vector<4x32xf32>
    %336 = arith.addf %334, %335 : vector<4x32xf32>
    %337 = vector.shape_cast %300 : vector<4x1xi1> to vector<4x1xi1>
    %338 = vector.broadcast %337 : vector<4x1xi1> to vector<4x32xi1>
    %339 = arith.select %338, %336, %286 : vector<4x32xi1>, vector<4x32xf32>
    %cst_121 = arith.constant 0.000000e+00 : f32
    %340 = vector.shape_cast %300 : vector<4x1xi1> to vector<4x1xi1>
    %341 = vector.broadcast %340 : vector<4x1xi1> to vector<4x32xi1>
    %342 = vector.broadcast %cst_121 : f32 to vector<4x32xf32>
    %343 = arith.select %341, %339, %342 : vector<4x32xi1>, vector<4x32xf32>
    %344 = arith.truncf %343 : vector<4x32xf32> to vector<4x32xbf16>
    %345 = arith.index_cast %c5_i32 : i32 to index
    %c0_122 = arith.constant 0 : index
    %c0_123 = arith.constant 0 : index
    %346 = vector.load %arg7[%345, %c0_122, %c0_123] : memref<8x4x32xbf16, #tpu.memory_space<vmem>>, vector<1x4x32xbf16>
    %347 = vector.shape_cast %346 : vector<1x4x32xbf16> to vector<4x32xbf16>
    %348 = vector.shape_cast %344 : vector<4x32xbf16> to vector<1x4x32xbf16>
    tpu.vector_store %arg7[%345, %c0_122, %c0_123], %348 {strides = array<i32>} : memref<8x4x32xbf16, #tpu.memory_space<vmem>>, vector<1x4x32xbf16>,
    %c6_i32 = arith.constant 6 : i32
    %349 = arith.index_cast %c6_i32 : i32 to index
    %c0_124 = arith.constant 0 : index
    %c0_125 = arith.constant 0 : index
    %350 = vector.load %arg12[%349, %c0_124, %c0_125] : memref<8x4x1xf32, #tpu.memory_space<vmem>>, vector<1x4x1xf32>
    %351 = vector.shape_cast %350 : vector<1x4x1xf32> to vector<4x1xf32>
    %cst_126 = arith.constant 0.000000e+00 : f32
    %352 = vector.broadcast %cst_126 : f32 to vector<4x1xf32>
    %353 = arith.cmpf ogt, %351, %352 : vector<4x1xf32>
    %354 = arith.index_cast %c6_i32 : i32 to index
    %c0_127 = arith.constant 0 : index
    %c0_128 = arith.constant 0 : index
    %355 = vector.load %arg9[%354, %c0_127, %c0_128] : memref<8x4x32xf32, #tpu.memory_space<vmem>>, vector<1x4x32xf32>
    %356 = vector.shape_cast %355 : vector<1x4x32xf32> to vector<4x32xf32>
    %357 = arith.index_cast %c6_i32 : i32 to index
    %c0_129 = arith.constant 0 : index
    %c0_130 = arith.constant 0 : index
    %358 = vector.load %arg10[%357, %c0_129, %c0_130] : memref<8x4x32xf32, #tpu.memory_space<vmem>>, vector<1x4x32xf32>
    %359 = vector.shape_cast %358 : vector<1x4x32xf32> to vector<4x32xf32>
    %360 = arith.index_cast %c6_i32 : i32 to index
    %c0_131 = arith.constant 0 : index
    %c0_132 = arith.constant 0 : index
    %361 = vector.load %arg11[%360, %c0_131, %c0_132] : memref<8x4x32xf32, #tpu.memory_space<vmem>>, vector<1x4x32xf32>
    %362 = vector.shape_cast %361 : vector<1x4x32xf32> to vector<4x32xf32>
    %363 = arith.truncf %339 : vector<4x32xf32> to vector<4x32xbf16>
    %cst_133 = arith.constant dense<0.000000e+00> : vector<4x96xf32>
    %364 = tpu.matmul %363, %28, %cst_133 {dimension_numbers = #tpu.dot_dimension_numbers<[1], [0], [0], [1], [0, 0, 1, 1], [], []>} : vector<4x32xbf16>, vector<32x96xbf16>, vector<4x96xf32> -> vector<4x96xf32>
    %365 = vector.extract_strided_slice %364 {offsets = [0, 0], sizes = [4, 32], strides = [1, 1]} : vector<4x96xf32> to vector<4x32xf32>
    %366 = arith.addf %356, %365 : vector<4x32xf32>
    %367 = arith.negf %366 : vector<4x32xf32>
    %368 = math.exp %367 : vector<4x32xf32>
    %cst_134 = arith.constant 1.000000e+00 : f32
    %369 = vector.broadcast %cst_134 : f32 to vector<4x32xf32>
    %370 = arith.addf %369, %368 : vector<4x32xf32>
    %371 = arith.divf %369, %370 : vector<4x32xf32>
    %372 = vector.extract_strided_slice %364 {offsets = [0, 32], sizes = [4, 32], strides = [1, 1]} : vector<4x96xf32> to vector<4x32xf32>
    %373 = arith.addf %359, %372 : vector<4x32xf32>
    %374 = arith.negf %373 : vector<4x32xf32>
    %375 = math.exp %374 : vector<4x32xf32>
    %cst_135 = arith.constant 1.000000e+00 : f32
    %376 = vector.broadcast %cst_135 : f32 to vector<4x32xf32>
    %377 = arith.addf %376, %375 : vector<4x32xf32>
    %378 = arith.divf %376, %377 : vector<4x32xf32>
    %379 = vector.extract_strided_slice %364 {offsets = [0, 64], sizes = [4, 32], strides = [1, 1]} : vector<4x96xf32> to vector<4x32xf32>
    %380 = vector.broadcast %29 : vector<1x32xf32> to vector<4x32xf32>
    %381 = arith.addf %379, %380 : vector<4x32xf32>
    %382 = arith.mulf %371, %381 : vector<4x32xf32>
    %383 = arith.addf %362, %382 : vector<4x32xf32>
    %384 = math.tanh %383 : vector<4x32xf32>
    %cst_136 = arith.constant 1.000000e+00 : f32
    %385 = vector.broadcast %cst_136 : f32 to vector<4x32xf32>
    %386 = arith.subf %385, %378 : vector<4x32xf32>
    %387 = arith.mulf %386, %384 : vector<4x32xf32>
    %388 = arith.mulf %378, %339 : vector<4x32xf32>
    %389 = arith.addf %387, %388 : vector<4x32xf32>
    %390 = vector.shape_cast %353 : vector<4x1xi1> to vector<4x1xi1>
    %391 = vector.broadcast %390 : vector<4x1xi1> to vector<4x32xi1>
    %392 = arith.select %391, %389, %339 : vector<4x32xi1>, vector<4x32xf32>
    %cst_137 = arith.constant 0.000000e+00 : f32
    %393 = vector.shape_cast %353 : vector<4x1xi1> to vector<4x1xi1>
    %394 = vector.broadcast %393 : vector<4x1xi1> to vector<4x32xi1>
    %395 = vector.broadcast %cst_137 : f32 to vector<4x32xf32>
    %396 = arith.select %394, %392, %395 : vector<4x32xi1>, vector<4x32xf32>
    %397 = arith.truncf %396 : vector<4x32xf32> to vector<4x32xbf16>
    %398 = arith.index_cast %c6_i32 : i32 to index
    %c0_138 = arith.constant 0 : index
    %c0_139 = arith.constant 0 : index
    %399 = vector.load %arg7[%398, %c0_138, %c0_139] : memref<8x4x32xbf16, #tpu.memory_space<vmem>>, vector<1x4x32xbf16>
    %400 = vector.shape_cast %399 : vector<1x4x32xbf16> to vector<4x32xbf16>
    %401 = vector.shape_cast %397 : vector<4x32xbf16> to vector<1x4x32xbf16>
    tpu.vector_store %arg7[%398, %c0_138, %c0_139], %401 {strides = array<i32>} : memref<8x4x32xbf16, #tpu.memory_space<vmem>>, vector<1x4x32xbf16>,
    %c7_i32 = arith.constant 7 : i32
    %402 = arith.index_cast %c7_i32 : i32 to index
    %c0_140 = arith.constant 0 : index
    %c0_141 = arith.constant 0 : index
    %403 = vector.load %arg12[%402, %c0_140, %c0_141] : memref<8x4x1xf32, #tpu.memory_space<vmem>>, vector<1x4x1xf32>
    %404 = vector.shape_cast %403 : vector<1x4x1xf32> to vector<4x1xf32>
    %cst_142 = arith.constant 0.000000e+00 : f32
    %405 = vector.broadcast %cst_142 : f32 to vector<4x1xf32>
    %406 = arith.cmpf ogt, %404, %405 : vector<4x1xf32>
    %407 = arith.index_cast %c7_i32 : i32 to index
    %c0_143 = arith.constant 0 : index
    %c0_144 = arith.constant 0 : index
    %408 = vector.load %arg9[%407, %c0_143, %c0_144] : memref<8x4x32xf32, #tpu.memory_space<vmem>>, vector<1x4x32xf32>
    %409 = vector.shape_cast %408 : vector<1x4x32xf32> to vector<4x32xf32>
    %410 = arith.index_cast %c7_i32 : i32 to index
    %c0_145 = arith.constant 0 : index
    %c0_146 = arith.constant 0 : index
    %411 = vector.load %arg10[%410, %c0_145, %c0_146] : memref<8x4x32xf32, #tpu.memory_space<vmem>>, vector<1x4x32xf32>
    %412 = vector.shape_cast %411 : vector<1x4x32xf32> to vector<4x32xf32>
    %413 = arith.index_cast %c7_i32 : i32 to index
    %c0_147 = arith.constant 0 : index
    %c0_148 = arith.constant 0 : index
    %414 = vector.load %arg11[%413, %c0_147, %c0_148] : memref<8x4x32xf32, #tpu.memory_space<vmem>>, vector<1x4x32xf32>
    %415 = vector.shape_cast %414 : vector<1x4x32xf32> to vector<4x32xf32>
    %416 = arith.truncf %392 : vector<4x32xf32> to vector<4x32xbf16>
    %cst_149 = arith.constant dense<0.000000e+00> : vector<4x96xf32>
    %417 = tpu.matmul %416, %28, %cst_149 {dimension_numbers = #tpu.dot_dimension_numbers<[1], [0], [0], [1], [0, 0, 1, 1], [], []>} : vector<4x32xbf16>, vector<32x96xbf16>, vector<4x96xf32> -> vector<4x96xf32>
    %418 = vector.extract_strided_slice %417 {offsets = [0, 0], sizes = [4, 32], strides = [1, 1]} : vector<4x96xf32> to vector<4x32xf32>
    %419 = arith.addf %409, %418 : vector<4x32xf32>
    %420 = arith.negf %419 : vector<4x32xf32>
    %421 = math.exp %420 : vector<4x32xf32>
    %cst_150 = arith.constant 1.000000e+00 : f32
    %422 = vector.broadcast %cst_150 : f32 to vector<4x32xf32>
    %423 = arith.addf %422, %421 : vector<4x32xf32>
    %424 = arith.divf %422, %423 : vector<4x32xf32>
    %425 = vector.extract_strided_slice %417 {offsets = [0, 32], sizes = [4, 32], strides = [1, 1]} : vector<4x96xf32> to vector<4x32xf32>
    %426 = arith.addf %412, %425 : vector<4x32xf32>
    %427 = arith.negf %426 : vector<4x32xf32>
    %428 = math.exp %427 : vector<4x32xf32>
    %cst_151 = arith.constant 1.000000e+00 : f32
    %429 = vector.broadcast %cst_151 : f32 to vector<4x32xf32>
    %430 = arith.addf %429, %428 : vector<4x32xf32>
    %431 = arith.divf %429, %430 : vector<4x32xf32>
    %432 = vector.extract_strided_slice %417 {offsets = [0, 64], sizes = [4, 32], strides = [1, 1]} : vector<4x96xf32> to vector<4x32xf32>
    %433 = vector.broadcast %29 : vector<1x32xf32> to vector<4x32xf32>
    %434 = arith.addf %432, %433 : vector<4x32xf32>
    %435 = arith.mulf %424, %434 : vector<4x32xf32>
    %436 = arith.addf %415, %435 : vector<4x32xf32>
    %437 = math.tanh %436 : vector<4x32xf32>
    %cst_152 = arith.constant 1.000000e+00 : f32
    %438 = vector.broadcast %cst_152 : f32 to vector<4x32xf32>
    %439 = arith.subf %438, %431 : vector<4x32xf32>
    %440 = arith.mulf %439, %437 : vector<4x32xf32>
    %441 = arith.mulf %431, %392 : vector<4x32xf32>
    %442 = arith.addf %440, %441 : vector<4x32xf32>
    %443 = vector.shape_cast %406 : vector<4x1xi1> to vector<4x1xi1>
    %444 = vector.broadcast %443 : vector<4x1xi1> to vector<4x32xi1>
    %445 = arith.select %444, %442, %392 : vector<4x32xi1>, vector<4x32xf32>
    %cst_153 = arith.constant 0.000000e+00 : f32
    %446 = vector.shape_cast %406 : vector<4x1xi1> to vector<4x1xi1>
    %447 = vector.broadcast %446 : vector<4x1xi1> to vector<4x32xi1>
    %448 = vector.broadcast %cst_153 : f32 to vector<4x32xf32>
    %449 = arith.select %447, %445, %448 : vector<4x32xi1>, vector<4x32xf32>
    %450 = arith.truncf %449 : vector<4x32xf32> to vector<4x32xbf16>
    %451 = arith.index_cast %c7_i32 : i32 to index
    %c0_154 = arith.constant 0 : index
    %c0_155 = arith.constant 0 : index
    %452 = vector.load %arg7[%451, %c0_154, %c0_155] : memref<8x4x32xbf16, #tpu.memory_space<vmem>>, vector<1x4x32xbf16>
    %453 = vector.shape_cast %452 : vector<1x4x32xbf16> to vector<4x32xbf16>
    %454 = vector.shape_cast %450 : vector<4x32xbf16> to vector<1x4x32xbf16>
    tpu.vector_store %arg7[%451, %c0_154, %c0_155], %454 {strides = array<i32>} : memref<8x4x32xbf16, #tpu.memory_space<vmem>>, vector<1x4x32xbf16>,
    %c8_i32_156 = arith.constant 8 : i32
    %c0_157 = arith.constant 0 : index
    %c0_158 = arith.constant 0 : index
    %455 = vector.load %arg8[%c0_157, %c0_158] : memref<4x32xf32, #tpu.memory_space<vmem>>, vector<4x32xf32>
    tpu.vector_store %arg8[%c0_157, %c0_158], %445 {strides = array<i32>} : memref<4x32xf32, #tpu.memory_space<vmem>>, vector<4x32xf32>,
    return
  }
  func.func @transform_0(%arg0: i32) -> (i32, i32) {
    %c0_i32 = arith.constant 0 : i32
    %c0_i32_0 = arith.constant 0 : i32
    %c0_i32_1 = arith.constant 0 : i32
    return %c0_i32, %c0_i32_0 : i32, i32
  }
  func.func @transform_1(%arg0: i32) -> (i32, i32, i32) {
    %c0_i32 = arith.constant 0 : i32
    %c0_i32_0 = arith.constant 0 : i32
    %c0_i32_1 = arith.constant 0 : i32
    return %arg0, %c0_i32, %c0_i32_0 : i32, i32, i32
  }
  func.func @transform_6(%arg0: i32) -> (i32, i32, i32) {
    %c0_i32 = arith.constant 0 : i32
    %c0_i32_0 = arith.constant 0 : i32
    %c0_i32_1 = arith.constant 0 : i32
    return %arg0, %c0_i32, %c0_i32_0 : i32, i32, i32
  }
}

</mosaic_0001>

<llo_original>
// kernel: tpu_custom_call.1
$region0: #{tpu_custom_call.1}
  #allocation0 [shape = 'u32[]', space=smem, size = 0x4, offset = 0x4, fixed_abs, tag = 'smem constant byte address 0x4 - core index']
  #allocation1 [shape = 'u32[72,128]{1,0:T(1,128)}', space=vmem, size = 0x9000, scoped, tag = 'internal scratch']
  #allocation2 [shape = 'f32[4,32]{1,0:T(4,128)}', space=vmem, size = 0x800, scoped, tag = 'scratch operand']
  #allocation3 [shape = 'f32[8,4,32]{2,1,0:T(4,128)}', space=vmem, size = 0x4000, scoped, tag = 'scratch operand']
  #allocation4 [shape = 'f32[8,4,32]{2,1,0:T(4,128)}', space=vmem, size = 0x4000, scoped, tag = 'scratch operand']
  #allocation5 [shape = 'f32[8,4,32]{2,1,0:T(4,128)}', space=vmem, size = 0x4000, scoped, tag = 'scratch operand']
  #allocation6 [shape = 'f32[8,4,1]{2,1,0:T(4,128)}', space=vmem, size = 0x4000, scoped, tag = 'scratch operand']
  #allocation7 [shape = 'bf16[32,96]{1,0:T(8,128)(2,1)}', space=vmem, size = 0x2000, scoped, tag = 'scratch operand']
  #allocation8 [shape = 'bf16[32,96]{1,0:T(8,128)(2,1)}', space=vmem, size = 0x2000, scoped, tag = 'scratch operand']
  #allocation9 [shape = 'f32[1,96]{1,0:T(1,128)}', space=vmem, size = 0x200, scoped, tag = 'scratch operand']
  #allocation10 [shape = 'f32[1,32]{1,0:T(1,128)}', space=vmem, size = 0x200, scoped, tag = 'scratch operand']
  #allocation11 [shape = 's32[1]{0}', space=sflag, size = 0x4, scoped, tag = 'scratch operand']
  #allocation16 [shape = 's32[]', space=sflag, size = 0x4, offset = 0, fixed_abs, tag = 'sflag constant byte address 0x0 - dummy sync flag']
  #allocation17 [shape = 's32[]', space=sflag, size = 0x4, offset = 0, fixed_abs, tag = 'sflag constant byte address 0x0 - dummy sync flag']
  #allocation18 [shape = 'u32[]', space=smem, size = 0x4, offset = 0x44, fixed_abs, tag = 'smem constant byte address 0x44 - assertion arg 0']
  #allocation19 [shape = 'u32[]', space=smem, size = 0x4, offset = 0x48, fixed_abs, tag = 'smem constant byte address 0x48 - assertion arg 1']
  #allocation20 [shape = 's32[]', space=sflag, size = 0x4, offset = 0, fixed_abs, tag = 'sflag constant byte address 0x0 - dummy sync flag']
  #allocation21 [shape = 's32[]', space=sflag, size = 0x4, offset = 0, fixed_abs, tag = 'sflag constant byte address 0x0 - dummy sync flag']
  #allocation22 [shape = 's32[]', space=sflag, size = 0x4, offset = 0, fixed_abs, tag = 'sflag constant byte address 0x0 - dummy sync flag']
  #allocation23 [shape = 's32[]', space=sflag, size = 0x4, offset = 0, fixed_abs, tag = 'sflag constant byte address 0x0 - dummy sync flag']
  %s0 = inlined_call_operand.vmem [shape: s32[4,1], index: 0, kind: input, shape index: {}]
  %s1 = inlined_call_operand.hbm [shape: bf16[8,4,32], index: 1, kind: input, shape index: {}]
  %s2 = inlined_call_operand.hbm [shape: bf16[32,96], index: 2, kind: input, shape index: {}]
  %s3 = inlined_call_operand.hbm [shape: bf16[32,96], index: 3, kind: input, shape index: {}]
  %s4 = inlined_call_operand.vmem [shape: f32[1,96], index: 4, kind: input, shape index: {}]
  %s5 = inlined_call_operand.vmem [shape: f32[1,32], index: 5, kind: input, shape index: {}]
  %s6 = inlined_call_operand.hbm [shape: bf16[8,4,32], index: 6, kind: output, shape index: {}]
  %s7 = sld [smem:[#allocation0]]
  $region94: #{tpu_custom_call.1} parent=0
    _
  %s9 = ssub.s32 1, %s7
  %s10 = scalar_select 0, %s9, %s7
  $region1: #{tpu_custom_call.1} parent=0
    #allocation12 [shape = 'u8[8192]{0}', space=vmem, size = 0x2000, scoped, tag = 'input window, operand 1, single buffered']
    #allocation13 [shape = 's32[1]{0}', space=sflag, size = 0x4, scoped, tag = 'scoped memory for tpu_custom_call.1']
    #allocation14 [shape = 's32[1]{0}', space=sflag, size = 0x4, scoped, tag = 'scoped memory for tpu_custom_call.1']
    #allocation15 [shape = 'u8[8192]{0}', space=vmem, size = 0x2000, scoped, tag = 'output window, operand 0, single buffered']
    %11 = vsyncpa [#allocation13], 0
    %12 = vsyncpa [#allocation14], 0
    // Predicated region
    $region2: #{tpu_custom_call.1} parent=1 // pred_check
      _
    $region3: #{tpu_custom_call.1} parent=1 // pred_check_branch
      %14 = sbr.rel (0) target = $region5
    $region4: #{tpu_custom_call.1} parent=1 // pred_region
      _
    $region5: #{tpu_custom_call.1} parent=1 // pred_fallthru
      _
    // Predicated region
    $region6: #{tpu_custom_call.1} parent=1 // pred_check
      _
    $region7: #{tpu_custom_call.1} parent=1 // pred_check_branch
      %16 = sbr.rel (0) target = $region9
    $region8: #{tpu_custom_call.1} parent=1 // pred_region
      %18 = vsyncadd [#allocation13], 0
      %s19 = sshll.u32 %s1, 4
      %s20 = int_to_ptr.hbm [resolvable:$true] %s19
      %s21 = sshll.u32 [#allocation12], 4
      %s22 = int_to_ptr.vmem [resolvable:$true] %s21
      %27 = dma.hbm_to_vmem [thread:$0]  %s20, 256, %s22, [#allocation13], 32, 32, 2
    $region9: #{tpu_custom_call.1} parent=1 // pred_fallthru
      _
    // Predicated region
    $region10: #{tpu_custom_call.1} parent=1 // pred_check
      _
    $region11: #{tpu_custom_call.1} parent=1 // pred_check_branch
      %29 = sbr.rel (0) target = $region13
    $region12: #{tpu_custom_call.1} parent=1 // pred_region
      %31 = dma.done [#allocation13], 256
    $region13: #{tpu_custom_call.1} parent=1 // pred_fallthru
      _
    %s33 = smul.u32 0, 8
    %p34 = scmp.eq.s32.totalorder 0, 0
    // Predicated region
    $region14: #{tpu_custom_call.1} parent=1 // pred_check
      %p35 = pneg %p34
    $region15: #{tpu_custom_call.1} parent=1 // pred_check_branch
      %37 = sbr.rel (%p35) target = $region17
    $region16: #{tpu_custom_call.1} parent=1 // pred_region
      %vm38 = vcmask 257024
      %39 = vst.msk [vmem:[#allocation2] sm:$0xf] %vm38, 0.0
      // Predicated region
      $region18: #{tpu_custom_call.1} parent=16 // pred_check
        _
      $region19: #{tpu_custom_call.1} parent=16 // pred_check_branch
        %41 = sbr.rel target = $region21
      $region20: #{tpu_custom_call.1} parent=16 // pred_region
        %42 = sst [smem:[#allocation18]] [#allocation17]
        %43 = sst [smem:[#allocation19]] [#allocation16]
      $region21: #{tpu_custom_call.1} parent=16 // pred_fallthru
        _
      %45 = shalt.err (0)
      %s47 = sshll.u32 %s2, 4
      %s48 = int_to_ptr.hbm [resolvable:$true] %s47
      %s49 = sshll.u32 [#allocation7], 4
      %s50 = int_to_ptr.vmem [resolvable:$true] %s49
      %52 = dma.hbm_to_vmem [thread:$0]  %s48, 256, %s50, [#allocation11]
      %s53 = smul.u32 4, 4
      %s54 = smul.u32 %s53, 1
      %s55 = sshll.u32 %s54, 4
      %56 = dma.done [#allocation11], %s55
      // Predicated region
      $region22: #{tpu_custom_call.1} parent=16 // pred_check
        _
      $region23: #{tpu_custom_call.1} parent=16 // pred_check_branch
        %58 = sbr.rel target = $region25
      $region24: #{tpu_custom_call.1} parent=16 // pred_region
        %59 = sst [smem:[#allocation18]] [#allocation21]
        %60 = sst [smem:[#allocation19]] [#allocation20]
      $region25: #{tpu_custom_call.1} parent=16 // pred_fallthru
        _
      %62 = shalt.err (0)
      %s64 = sshll.u32 %s3, 4
      %s65 = int_to_ptr.hbm [resolvable:$true] %s64
      %s66 = sshll.u32 [#allocation8], 4
      %s67 = int_to_ptr.vmem [resolvable:$true] %s66
      %69 = dma.hbm_to_vmem [thread:$0]  %s65, 256, %s67, [#allocation11]
      %s70 = sshll.u32 %s54, 4
      %71 = dma.done [#allocation11], %s70
      // Predicated region
      $region26: #{tpu_custom_call.1} parent=16 // pred_check
        _
      $region27: #{tpu_custom_call.1} parent=16 // pred_check_branch
        %73 = sbr.rel target = $region29
      $region28: #{tpu_custom_call.1} parent=16 // pred_region
        // Predicated region
        $region41: #{tpu_custom_call.1} parent=28 // pred_check
          _
        $region42: #{tpu_custom_call.1} parent=28 // pred_check_branch
          %89 = sbr.rel (0) target = $region44
        $region43: #{tpu_custom_call.1} parent=28 // pred_region
          %s91 = ssub.s32 2, 1
          loop: start=0, step=1, limit=1
          $region45: #{tpu_custom_call.1} parent=43 // loop_pre_header
            _
          $region46: #{tpu_custom_call.1} parent=43 // loop_header
            %s93 = sphi 0, %s97
            %p94 = scmp.ge.s32.totalorder %s93, 1
            %s98 = sphi %s4, %s4
            %s99 = sphi [#allocation9], [#allocation9]
          $region47: #{tpu_custom_call.1} parent=43 // loop_header_branch
            %96 = sbr.rel (%p94) target = $region51
          $region48: #{tpu_custom_call.1} parent=43 // loop_body
            %v100 = vld [vmem:[%s98] sm:%s91]
            %101 = vst [vmem:[%s99] sm:%s91] %v100
          $region49: #{tpu_custom_call.1} parent=43 // loop_footer
            %s97 = sadd.s32 1, %s93
          $region50: #{tpu_custom_call.1} parent=43 // loop_footer_branch
            %92 = sbr.rel target = $region46
          $region51: #{tpu_custom_call.1} parent=43 // loop_exit
            _
        $region44: #{tpu_custom_call.1} parent=28 // pred_fallthru
          _
      $region29: #{tpu_custom_call.1} parent=16 // pred_fallthru
        _
      // Predicated region
      $region30: #{tpu_custom_call.1} parent=16 // pred_check
        _
      $region31: #{tpu_custom_call.1} parent=16 // pred_check_branch
        %75 = sbr.rel (0) target = $region33
      $region32: #{tpu_custom_call.1} parent=16 // pred_region
        %s77 = ssub.s32 2, 1
        loop: start=0, step=1, limit=1
        $region34: #{tpu_custom_call.1} parent=32 // loop_pre_header
          _
        $region35: #{tpu_custom_call.1} parent=32 // loop_header
          %s79 = sphi 0, %s83
          %p80 = scmp.ge.s32.totalorder %s79, 1
          %s84 = sphi %s4, %s4
          %s85 = sphi [#allocation9], [#allocation9]
        $region36: #{tpu_custom_call.1} parent=32 // loop_header_branch
          %82 = sbr.rel (%p80) target = $region40
        $region37: #{tpu_custom_call.1} parent=32 // loop_body
          %v86 = vld [vmem:[%s84] sm:%s77]
          %87 = vst [vmem:[%s85] sm:%s77] %v86
        $region38: #{tpu_custom_call.1} parent=32 // loop_footer
          %s83 = sadd.s32 1, %s79
        $region39: #{tpu_custom_call.1} parent=32 // loop_footer_branch
          %78 = sbr.rel target = $region35
        $region40: #{tpu_custom_call.1} parent=32 // loop_exit
          _
      $region33: #{tpu_custom_call.1} parent=16 // pred_fallthru
        _
      // Predicated region
      $region52: #{tpu_custom_call.1} parent=16 // pred_check
        _
      $region53: #{tpu_custom_call.1} parent=16 // pred_check_branch
        %104 = sbr.rel (0) target = $region55
      $region54: #{tpu_custom_call.1} parent=16 // pred_region
        %105 = vsyncadd [#allocation11], 16
      $region55: #{tpu_custom_call.1} parent=16 // pred_fallthru
        _
      %s106 = smul.u32 1, 1
      %s107 = sshll.u32 %s106, 4
      %108 = dma.done [#allocation11], %s107
      // Predicated region
      $region56: #{tpu_custom_call.1} parent=16 // pred_check
        _
      $region57: #{tpu_custom_call.1} parent=16 // pred_check_branch
        %110 = sbr.rel target = $region59
      $region58: #{tpu_custom_call.1} parent=16 // pred_region
        // Predicated region
        $region71: #{tpu_custom_call.1} parent=58 // pred_check
          _
        $region72: #{tpu_custom_call.1} parent=58 // pred_check_branch
          %126 = sbr.rel (0) target = $region74
        $region73: #{tpu_custom_call.1} parent=58 // pred_region
          %s128 = ssub.s32 2, 1
          loop: start=0, step=1, limit=1
          $region75: #{tpu_custom_call.1} parent=73 // loop_pre_header
            _
          $region76: #{tpu_custom_call.1} parent=73 // loop_header
            %s130 = sphi 0, %s134
            %p131 = scmp.ge.s32.totalorder %s130, 1
            %s135 = sphi %s5, %s5
            %s136 = sphi [#allocation10], [#allocation10]
          $region77: #{tpu_custom_call.1} parent=73 // loop_header_branch
            %133 = sbr.rel (%p131) target = $region81
          $region78: #{tpu_custom_call.1} parent=73 // loop_body
            %v137 = vld [vmem:[%s135] sm:%s128]
            %138 = vst [vmem:[%s136] sm:%s128] %v137
          $region79: #{tpu_custom_call.1} parent=73 // loop_footer
            %s134 = sadd.s32 1, %s130
          $region80: #{tpu_custom_call.1} parent=73 // loop_footer_branch
            %129 = sbr.rel target = $region76
          $region81: #{tpu_custom_call.1} parent=73 // loop_exit
            _
        $region74: #{tpu_custom_call.1} parent=58 // pred_fallthru
          _
      $region59: #{tpu_custom_call.1} parent=16 // pred_fallthru
        _
      // Predicated region
      $region60: #{tpu_custom_call.1} parent=16 // pred_check
        _
      $region61: #{tpu_custom_call.1} parent=16 // pred_check_branch
        %112 = sbr.rel (0) target = $region63
      $region62: #{tpu_custom_call.1} parent=16 // pred_region
        %s114 = ssub.s32 2, 1
        loop: start=0, step=1, limit=1
        $region64: #{tpu_custom_call.1} parent=62 // loop_pre_header
          _
        $region65: #{tpu_custom_call.1} parent=62 // loop_header
          %s116 = sphi 0, %s120
          %p117 = scmp.ge.s32.totalorder %s116, 1
          %s121 = sphi %s5, %s5
          %s122 = sphi [#allocation10], [#allocation10]
        $region66: #{tpu_custom_call.1} parent=62 // loop_header_branch
          %119 = sbr.rel (%p117) target = $region70
        $region67: #{tpu_custom_call.1} parent=62 // loop_body
          %v123 = vld [vmem:[%s121] sm:%s114]
          %124 = vst [vmem:[%s122] sm:%s114] %v123
        $region68: #{tpu_custom_call.1} parent=62 // loop_footer
          %s120 = sadd.s32 1, %s116
        $region69: #{tpu_custom_call.1} parent=62 // loop_footer_branch
          %115 = sbr.rel target = $region65
        $region70: #{tpu_custom_call.1} parent=62 // loop_exit
          _
      $region63: #{tpu_custom_call.1} parent=16 // pred_fallthru
        _
      // Predicated region
      $region82: #{tpu_custom_call.1} parent=16 // pred_check
        _
      $region83: #{tpu_custom_call.1} parent=16 // pred_check_branch
        %141 = sbr.rel (0) target = $region85
      $region84: #{tpu_custom_call.1} parent=16 // pred_region
        %142 = vsyncadd [#allocation11], 16
      $region85: #{tpu_custom_call.1} parent=16 // pred_fallthru
        _
      %s143 = sshll.u32 %s106, 4
      %144 = dma.done [#allocation11], %s143
    $region17: #{tpu_custom_call.1} parent=1 // pred_fallthru
      _
    %v145 = vstv %s33
    %v146 = vadd.s32 %v145, 1
    %v147 = vadd.s32 %v145, 2
    %v148 = vadd.s32 %v145, 3
    %v149 = vadd.s32 %v145, 4
    %v150 = vadd.s32 %v145, 5
    %v151 = vadd.s32 %v145, 6
    %v152 = vadd.s32 %v145, 7
    %v153 = vld [vmem:[%s0] sm:$0xf]
    %vm154 = vcmp.lt.s32.totalorder %v145, %v153
    %vm155 = vcmp.lt.s32.totalorder %v146, %v153
    %vm156 = vcmp.lt.s32.totalorder %v147, %v153
    %vm157 = vcmp.lt.s32.totalorder %v148, %v153
    %vm158 = vcmp.lt.s32.totalorder %v149, %v153
    %vm159 = vcmp.lt.s32.totalorder %v150, %v153
    %vm160 = vcmp.lt.s32.totalorder %v151, %v153
    %vm161 = vcmp.lt.s32.totalorder %v152, %v153
    %v162 = vsel %vm154, 1, 0
    %v163 = vsel %vm155, 1, 0
    %v164 = vsel %vm156, 1, 0
    %v165 = vsel %vm157, 1, 0
    %v166 = vsel %vm158, 1, 0
    %v167 = vsel %vm159, 1, 0
    %v168 = vsel %vm160, 1, 0
    %v169 = vsel %vm161, 1, 0
    %v170 = vcvt.s32.f32 %v162
    %v171 = vcvt.s32.f32 %v163
    %v172 = vcvt.s32.f32 %v164
    %v173 = vcvt.s32.f32 %v165
    %v174 = vcvt.s32.f32 %v166
    %v175 = vcvt.s32.f32 %v167
    %v176 = vcvt.s32.f32 %v168
    %v177 = vcvt.s32.f32 %v169
    %vm178 = vcmask 3072
    %179 = vst.msk [vmem:[#allocation6] sm:$0xf] %vm178, %v170
    %180 = vst.msk [vmem:[#allocation6 + $0x4] sm:$0xf] %vm178, %v171
    %181 = vst.msk [vmem:[#allocation6 + $0x8] sm:$0xf] %vm178, %v172
    %182 = vst.msk [vmem:[#allocation6 + $0xc] sm:$0xf] %vm178, %v173
    %183 = vst.msk [vmem:[#allocation6 + $0x10] sm:$0xf] %vm178, %v174
    %184 = vst.msk [vmem:[#allocation6 + $0x14] sm:$0xf] %vm178, %v175
    %185 = vst.msk [vmem:[#allocation6 + $0x18] sm:$0xf] %vm178, %v176
    %186 = vst.msk [vmem:[#allocation6 + $0x1c] sm:$0xf] %vm178, %v177
    %v187 = vld [vmem:[#allocation12] sm:$0x3]
    %v188 = vld [vmem:[#allocation12 + $0x2] sm:$0x3]
    %v189 = vld [vmem:[#allocation12 + $0x4] sm:$0x3]
    %v190 = vld [vmem:[#allocation12 + $0x6] sm:$0x3]
    %v191 = vld [vmem:[#allocation12 + $0x8] sm:$0x3]
    %v192 = vld [vmem:[#allocation12 + $0xa] sm:$0x3]
    %v193 = vld [vmem:[#allocation12 + $0xc] sm:$0x3]
    %v194 = vld [vmem:[#allocation12 + $0xe] sm:$0x3]
    %v195 = vld [vmem:[#allocation7] sm:$0xf]
    %v196 = vld [vmem:[#allocation7 + $0x4] sm:$0xf]
    %v197 = vld [vmem:[#allocation7 + $0x8] sm:$0xf]
    %v198 = vld [vmem:[#allocation7 + $0xc] sm:$0xf]
    %v199 = vld [vmem:[#allocation9] sm:$0x1]
    %v201 = vperm.slane %v199, 0
    %204 = vst [vmem:[#allocation1] ss:$4 sm:$0xff] %v187
    %s206 = scalar_lea.vmem [#allocation1], 1
    %207 = vst [vmem:[%s206] ss:$4 sm:$0xff] %v188
    %s209 = scalar_lea.vmem [#allocation1], 2
    %210 = vst [vmem:[%s209] ss:$4 sm:$0xff] %v189
    %s212 = scalar_lea.vmem [#allocation1], 3
    %213 = vst [vmem:[%s212] ss:$4 sm:$0xff] %v190
    %s215 = scalar_lea.vmem [#allocation1], 32
    %216 = vst [vmem:[%s215] ss:$4 sm:$0xff] %v191
    %s218 = scalar_lea.vmem [#allocation1], 33
    %219 = vst [vmem:[%s218] ss:$4 sm:$0xff] %v192
    %s221 = scalar_lea.vmem [#allocation1], 34
    %222 = vst [vmem:[%s221] ss:$4 sm:$0xff] %v193
    %s224 = scalar_lea.vmem [#allocation1], 35
    %225 = vst [vmem:[%s224] ss:$4 sm:$0xff] %v194
    %v226 = vld.sshfl [vmem:[#allocation1] sm:$0xff pattern:$0x73625140]
    %v227 = vld.sshfl [vmem:[#allocation1 + $0x20] sm:$0xff pattern:$0x73625140]
    %v232 = vunpack.c.l.b16 %v195
    %v233 = vunpack.c.l.b16 %v196
    %v234 = vunpack.c.l.b16 %v197
    %v235 = vunpack.c.l.b16 %v198
    %v236 = vpack.c.b16 %v233, %v232
    %v237 = vpack.c.b16 %v235, %v234
    %vm240 = vcmask 261120
    %v241 = vsel %vm240, %v226, 0
    %v243 = vsel %vm240, %v227, 0
    %245 = vmatpush.bf16.msra.mxu0 0
    %246 = vmatpush.bf16.msra.mxu0 0
    %247 = vmatpush.bf16.msra.mxu0 0
    %248 = vmatpush.bf16.msra.mxu0 0
    %249 = vmatpush.bf16.msra.mxu0 0
    %250 = vmatpush.bf16.msra.mxu0 0
    %251 = vmatpush.bf16.msra.mxu0 %v237
    %252 = vmatpush.bf16.msra.mxu0 %v236
    %253 = vmatmul.bf16.gmra.mxu0 %v241
    %v254 = vpop.f32.mrf.mxu0
    %v255 = vadd.f32 %v201, %v254
    %v256 = vpop.f32.mrf.mxu0
    %v257 = vadd.f32 %v201, %v256
    %258 = vmatmul.bf16.gmra.mxu0 %v243
    %v259 = vpop.f32.mrf.mxu0
    %v260 = vadd.f32 %v201, %v259
    %v261 = vpop.f32.mrf.mxu0
    %v262 = vadd.f32 %v201, %v261
    %263 = vdwg.mxu0
    %v268 = vrot.slane %v255, 4
    %v269 = vrot.slane %v257, 4
    %v270 = vrot.slane %v260, 4
    %v271 = vrot.slane %v262, 4
    %vm276 = vcmask 257024
    %277 = vst.msk [vmem:[#allocation3] sm:$0xf] %vm276, %v255
    %278 = vst.msk [vmem:[#allocation3 + $0x4] sm:$0xf] %vm276, %v268
    %279 = vst.msk [vmem:[#allocation3 + $0x8] sm:$0xf] %vm276, %v257
    %280 = vst.msk [vmem:[#allocation3 + $0xc] sm:$0xf] %vm276, %v269
    %281 = vst.msk [vmem:[#allocation3 + $0x10] sm:$0xf] %vm276, %v260
    %282 = vst.msk [vmem:[#allocation3 + $0x14] sm:$0xf] %vm276, %v270
    %283 = vst.msk [vmem:[#allocation3 + $0x18] sm:$0xf] %vm276, %v262
    %284 = vst.msk [vmem:[#allocation3 + $0x1c] sm:$0xf] %vm276, %v271
    %285 = vst [vmem:[#allocation1] ss:$2 sm:$0xff] %v255
    %v286 = vld.sshfl [vmem:[#allocation1] sm:$0xff pattern:$0x75316420]
    %s287 = scalar_lea.vmem [#allocation1], 16
    %288 = vst [vmem:[%s287] ss:$2 sm:$0xff] %v268
    %v289 = vld.sshfl [vmem:[#allocation1 + $0x10] sm:$0xff pattern:$0x75316420]
    %s290 = scalar_lea.vmem [#allocation1], 32
    %291 = vst [vmem:[%s290] ss:$2 sm:$0xff] %v257
    %v292 = vld.sshfl [vmem:[#allocation1 + $0x20] sm:$0xff pattern:$0x75316420]
    %s293 = scalar_lea.vmem [#allocation1], 48
    %294 = vst [vmem:[%s293] ss:$2 sm:$0xff] %v269
    %v295 = vld.sshfl [vmem:[#allocation1 + $0x30] sm:$0xff pattern:$0x75316420]
    %296 = vst [vmem:[#allocation1] ss:$2 sm:$0xff] %v260
    %v297 = vld.sshfl [vmem:[#allocation1] sm:$0xff pattern:$0x75316420]
    %298 = vst [vmem:[%s287] ss:$2 sm:$0xff] %v270
    %v299 = vld.sshfl [vmem:[#allocation1 + $0x10] sm:$0xff pattern:$0x75316420]
    %300 = vst [vmem:[%s290] ss:$2 sm:$0xff] %v262
    %v301 = vld.sshfl [vmem:[#allocation1 + $0x20] sm:$0xff pattern:$0x75316420]
    %302 = vst [vmem:[%s293] ss:$2 sm:$0xff] %v271
    %v303 = vld.sshfl [vmem:[#allocation1 + $0x30] sm:$0xff pattern:$0x75316420]
    %304 = vrot.lane.b32.xlu0 %v286, 96
    %v305 = vpop.permute.xlu0 %304
    %306 = vrot.lane.b32.xlu0 %v289, 96
    %v307 = vpop.permute.xlu0 %306
    %308 = vrot.lane.b32.xlu0 %v292, 96
    %v309 = vpop.permute.xlu0 %308
    %310 = vrot.lane.b32.xlu0 %v295, 96
    %v311 = vpop.permute.xlu0 %310
    %312 = vrot.lane.b32.xlu0 %v297, 96
    %v313 = vpop.permute.xlu0 %312
    %314 = vrot.lane.b32.xlu0 %v299, 96
    %v315 = vpop.permute.xlu0 %314
    %316 = vrot.lane.b32.xlu0 %v301, 96
    %v317 = vpop.permute.xlu0 %316
    %318 = vrot.lane.b32.xlu0 %v303, 96
    %v319 = vpop.permute.xlu0 %318
    %328 = vst.msk [vmem:[#allocation4] sm:$0xf] %vm276, %v305
    %329 = vst.msk [vmem:[#allocation4 + $0x4] sm:$0xf] %vm276, %v307
    %330 = vst.msk [vmem:[#allocation4 + $0x8] sm:$0xf] %vm276, %v309
    %331 = vst.msk [vmem:[#allocation4 + $0xc] sm:$0xf] %vm276, %v311
    %332 = vst.msk [vmem:[#allocation4 + $0x10] sm:$0xf] %vm276, %v313
    %333 = vst.msk [vmem:[#allocation4 + $0x14] sm:$0xf] %vm276, %v315
    %334 = vst.msk [vmem:[#allocation4 + $0x18] sm:$0xf] %vm276, %v317
    %335 = vst.msk [vmem:[#allocation4 + $0x1c] sm:$0xf] %vm276, %v319
    %336 = vst [vmem:[#allocation1] ss:$2 sm:$0xff] %v255
    %v337 = vld.sshfl [vmem:[#allocation1] sm:$0xff pattern:$0x75316420]
    %s338 = scalar_lea.vmem [#allocation1], 16
    %339 = vst [vmem:[%s338] ss:$2 sm:$0xff] %v268
    %v340 = vld.sshfl [vmem:[#allocation1 + $0x10] sm:$0xff pattern:$0x75316420]
    %s341 = scalar_lea.vmem [#allocation1], 32
    %342 = vst [vmem:[%s341] ss:$2 sm:$0xff] %v257
    %v343 = vld.sshfl [vmem:[#allocation1 + $0x20] sm:$0xff pattern:$0x75316420]
    %s344 = scalar_lea.vmem [#allocation1], 48
    %345 = vst [vmem:[%s344] ss:$2 sm:$0xff] %v269
    %v346 = vld.sshfl [vmem:[#allocation1 + $0x30] sm:$0xff pattern:$0x75316420]
    %347 = vst [vmem:[#allocation1] ss:$2 sm:$0xff] %v260
    %v348 = vld.sshfl [vmem:[#allocation1] sm:$0xff pattern:$0x75316420]
    %349 = vst [vmem:[%s338] ss:$2 sm:$0xff] %v270
    %v350 = vld.sshfl [vmem:[#allocation1 + $0x10] sm:$0xff pattern:$0x75316420]
    %351 = vst [vmem:[%s341] ss:$2 sm:$0xff] %v262
    %v352 = vld.sshfl [vmem:[#allocation1 + $0x20] sm:$0xff pattern:$0x75316420]
    %353 = vst [vmem:[%s344] ss:$2 sm:$0xff] %v271
    %v354 = vld.sshfl [vmem:[#allocation1 + $0x30] sm:$0xff pattern:$0x75316420]
    %355 = vrot.lane.b32.xlu0 %v337, 64
    %v356 = vpop.permute.xlu0 %355
    %357 = vrot.lane.b32.xlu0 %v340, 64
    %v358 = vpop.permute.xlu0 %357
    %359 = vrot.lane.b32.xlu0 %v343, 64
    %v360 = vpop.permute.xlu0 %359
    %361 = vrot.lane.b32.xlu0 %v346, 64
    %v362 = vpop.permute.xlu0 %361
    %363 = vrot.lane.b32.xlu0 %v348, 64
    %v364 = vpop.permute.xlu0 %363
    %365 = vrot.lane.b32.xlu0 %v350, 64
    %v366 = vpop.permute.xlu0 %365
    %367 = vrot.lane.b32.xlu0 %v352, 64
    %v368 = vpop.permute.xlu0 %367
    %369 = vrot.lane.b32.xlu0 %v354, 64
    %v370 = vpop.permute.xlu0 %369
    %379 = vst.msk [vmem:[#allocation5] sm:$0xf] %vm276, %v356
    %380 = vst.msk [vmem:[#allocation5 + $0x4] sm:$0xf] %vm276, %v358
    %381 = vst.msk [vmem:[#allocation5 + $0x8] sm:$0xf] %vm276, %v360
    %382 = vst.msk [vmem:[#allocation5 + $0xc] sm:$0xf] %vm276, %v362
    %383 = vst.msk [vmem:[#allocation5 + $0x10] sm:$0xf] %vm276, %v364
    %384 = vst.msk [vmem:[#allocation5 + $0x14] sm:$0xf] %vm276, %v366
    %385 = vst.msk [vmem:[#allocation5 + $0x18] sm:$0xf] %vm276, %v368
    %386 = vst.msk [vmem:[#allocation5 + $0x1c] sm:$0xf] %vm276, %v370
    %v387 = vld [vmem:[#allocation8] sm:$0xf]
    %v388 = vld [vmem:[#allocation8 + $0x4] sm:$0xf]
    %v389 = vld [vmem:[#allocation8 + $0x8] sm:$0xf]
    %v390 = vld [vmem:[#allocation8 + $0xc] sm:$0xf]
    %v391 = vld [vmem:[#allocation10] sm:$0x1]
    %v392 = vld [vmem:[#allocation2] sm:$0xf]
    %v393 = vld [vmem:[#allocation6] sm:$0xf]
    %vm394 = vcmp.gt.f32.partialorder %v393, 0.0
    %v395 = vld [vmem:[#allocation3] sm:$0xf]
    %v396 = vld [vmem:[#allocation4] sm:$0xf]
    %v397 = vld [vmem:[#allocation5] sm:$0xf]
    %v398 = vpack.c.bf16 %v392, %v392
    %v403 = vunpack.c.l.b16 %v387
    %v404 = vunpack.c.l.b16 %v388
    %v405 = vunpack.c.l.b16 %v389
    %v406 = vunpack.c.l.b16 %v390
    %v407 = vpack.c.b16 %v404, %v403
    %v408 = vpack.c.b16 %v406, %v405
    %v412 = vsel %vm240, %v398, 0
    %414 = vmatpush.bf16.msra.mxu0 0
    %415 = vmatpush.bf16.msra.mxu0 0
    %416 = vmatpush.bf16.msra.mxu0 0
    %417 = vmatpush.bf16.msra.mxu0 0
    %418 = vmatpush.bf16.msra.mxu0 0
    %419 = vmatpush.bf16.msra.mxu0 0
    %420 = vmatpush.bf16.msra.mxu0 %v408
    %421 = vmatpush.bf16.msra.mxu0 %v407
    %422 = vmatmul.bf16.gmra.mxu0 %v412
    %v423 = vpop.f32.mrf.mxu0
    %v424 = vadd.f32 0.0, %v423
    %v425 = vpop.f32.mrf.mxu0
    %426 = vdwg.mxu0
    %v427 = vadd.f32 %v395, %v424
    %v428 = vxor.u32 %v427, 2147483648
    %v429 = vmul.f32 %v428, 1.442695
    %v430 = vpow.pop %v429
    %v431 = vadd.f32 %v430, 1.0
    %v432 = vrcp.pop %v431
    %v433 = vmul.f32 %v431, %v432
    %v434 = vsub.f32 1.0, %v433
    %v435 = vmul.f32 %v432, %v434
    %v436 = vadd.f32 %v432, %v435
    %vm437 = vweird.f32 %v431
    %vm438 = vweird.f32 %v432
    %vm439 = vmor %vm437, %vm438
    %v440 = vsel %vm439, %v432, %v436
    %v441 = vand.u32 2147483647, %v431
    %vm442 = vcmp.eq.f32.partialorder %v441, 8.507059e+37
    %v443 = vand.u32 %v431, 2147483648
    %v444 = vor.u32 1.1754944e-38, %v443
    %v445 = vsel %vm442, %v444, %v440
    %v446 = vmul.f32 1.0, %v445
    %448 = vrot.lane.b32.xlu0 %v424, 96
    %v449 = vpop.permute.xlu0 %448
    %v451 = vadd.f32 %v396, %v449
    %v452 = vxor.u32 %v451, 2147483648
    %v453 = vmul.f32 %v452, 1.442695
    %v454 = vpow.pop %v453
    %v455 = vadd.f32 %v454, 1.0
    %v456 = vrcp.pop %v455
    %v457 = vmul.f32 %v455, %v456
    %v458 = vsub.f32 1.0, %v457
    %v459 = vmul.f32 %v456, %v458
    %v460 = vadd.f32 %v456, %v459
    %vm461 = vweird.f32 %v455
    %vm462 = vweird.f32 %v456
    %vm463 = vmor %vm461, %vm462
    %v464 = vsel %vm463, %v456, %v460
    %v465 = vand.u32 2147483647, %v455
    %vm466 = vcmp.eq.f32.partialorder %v465, 8.507059e+37
    %v467 = vand.u32 %v455, 2147483648
    %v468 = vor.u32 1.1754944e-38, %v467
    %v469 = vsel %vm466, %v468, %v464
    %v470 = vmul.f32 1.0, %v469
    %v472 = vperm.slane %v391, 0
    %473 = vrot.lane.b32.xlu0 %v472, 64
    %v474 = vpop.permute.xlu0 %473
    %v476 = vadd.f32 %v424, %v474
    %478 = vrot.lane.b32.xlu0 %v476, 64
    %v479 = vpop.permute.xlu0 %478
    %v481 = vmul.f32 %v446, %v479
    %v482 = vadd.f32 %v397, %v481
    %v483 = vtanh.pop %v482
    %v484 = vsub.f32 1.0, %v470
    %v485 = vmul.f32 %v484, %v483
    %v486 = vmul.f32 %v470, %v392
    %v487 = vadd.f32 %v485, %v486
    %v488 = vsel %vm394, 1, 0
    %489 = vset.pattern.permute.xlu0 0
    %490 = vperm.xlu0 %489, %v488
    %v491 = vpop.permute.xlu0 %490
    %vm492 = vcmp.eq.s32.totalorder %v491, 1
    %v493 = vsel %vm492, %v487, %v392
    %v494 = vsel %vm492, %v487, 0.0
    %v495 = vpack.c.bf16 %v494, %v494
    %vm496 = vcmask 254976
    %497 = vst.msk [vmem:[#allocation15] sm:$0x3] %vm496, %v495
    %s498 = scalar_lea.vmem [#allocation6], 4
    %v499 = vld [vmem:[%s498] sm:$0xf]
    %vm500 = vcmp.gt.f32.partialorder %v499, 0.0
    %s501 = scalar_lea.vmem [#allocation3], 4
    %v502 = vld [vmem:[%s501] sm:$0xf]
    %s503 = scalar_lea.vmem [#allocation4], 4
    %v504 = vld [vmem:[%s503] sm:$0xf]
    %s505 = scalar_lea.vmem [#allocation5], 4
    %v506 = vld [vmem:[%s505] sm:$0xf]
    %v507 = vpack.c.bf16 %v493, %v493
    %v509 = vsel %vm240, %v507, 0
    %511 = vmatpush.bf16.msra.mxu0 0
    %512 = vmatpush.bf16.msra.mxu0 0
    %513 = vmatpush.bf16.msra.mxu0 0
    %514 = vmatpush.bf16.msra.mxu0 0
    %515 = vmatpush.bf16.msra.mxu0 0
    %516 = vmatpush.bf16.msra.mxu0 0
    %517 = vmatpush.bf16.msra.mxu0 %v408
    %518 = vmatpush.bf16.msra.mxu0 %v407
    %519 = vmatmul.bf16.gmra.mxu0 %v509
    %v520 = vpop.f32.mrf.mxu0
    %v521 = vadd.f32 0.0, %v520
    %v522 = vpop.f32.mrf.mxu0
    %523 = vdwg.mxu0
    %v524 = vadd.f32 %v502, %v521
    %v525 = vxor.u32 %v524, 2147483648
    %v526 = vmul.f32 %v525, 1.442695
    %v527 = vpow.pop %v526
    %v528 = vadd.f32 %v527, 1.0
    %v529 = vrcp.pop %v528
    %v530 = vmul.f32 %v528, %v529
    %v531 = vsub.f32 1.0, %v530
    %v532 = vmul.f32 %v529, %v531
    %v533 = vadd.f32 %v529, %v532
    %vm534 = vweird.f32 %v528
    %vm535 = vweird.f32 %v529
    %vm536 = vmor %vm534, %vm535
    %v537 = vsel %vm536, %v529, %v533
    %v538 = vand.u32 2147483647, %v528
    %vm539 = vcmp.eq.f32.partialorder %v538, 8.507059e+37
    %v540 = vand.u32 %v528, 2147483648
    %v541 = vor.u32 1.1754944e-38, %v540
    %v542 = vsel %vm539, %v541, %v537
    %v543 = vmul.f32 1.0, %v542
    %545 = vrot.lane.b32.xlu0 %v521, 96
    %v546 = vpop.permute.xlu0 %545
    %v548 = vadd.f32 %v504, %v546
    %v549 = vxor.u32 %v548, 2147483648
    %v550 = vmul.f32 %v549, 1.442695
    %v551 = vpow.pop %v550
    %v552 = vadd.f32 %v551, 1.0
    %v553 = vrcp.pop %v552
    %v554 = vmul.f32 %v552, %v553
    %v555 = vsub.f32 1.0, %v554
    %v556 = vmul.f32 %v553, %v555
    %v557 = vadd.f32 %v553, %v556
    %vm558 = vweird.f32 %v552
    %vm559 = vweird.f32 %v553
    %vm560 = vmor %vm558, %vm559
    %v561 = vsel %vm560, %v553, %v557
    %v562 = vand.u32 2147483647, %v552
    %vm563 = vcmp.eq.f32.partialorder %v562, 8.507059e+37
    %v564 = vand.u32 %v552, 2147483648
    %v565 = vor.u32 1.1754944e-38, %v564
    %v566 = vsel %vm563, %v565, %v561
    %v567 = vmul.f32 1.0, %v566
    %v568 = vadd.f32 %v521, %v474
    %570 = vrot.lane.b32.xlu0 %v568, 64
    %v571 = vpop.permute.xlu0 %570
    %v573 = vmul.f32 %v543, %v571
    %v574 = vadd.f32 %v506, %v573
    %v575 = vtanh.pop %v574
    %v576 = vsub.f32 1.0, %v567
    %v577 = vmul.f32 %v576, %v575
    %v578 = vmul.f32 %v567, %v493
    %v579 = vadd.f32 %v577, %v578
    %v580 = vsel %vm500, 1, 0
    %581 = vset.pattern.permute.xlu0 0
    %582 = vperm.xlu0 %581, %v580
    %v583 = vpop.permute.xlu0 %582
    %vm584 = vcmp.eq.s32.totalorder %v583, 1
    %v585 = vsel %vm584, %v579, %v493
    %v586 = vsel %vm584, %v579, 0.0
    %v587 = vpack.c.bf16 %v586, %v586
    %s588 = scalar_lea.vmem [#allocation15], 2
    %589 = vst.msk [vmem:[%s588] sm:$0x3] %vm496, %v587
    %s590 = scalar_lea.vmem [#allocation6], 8
    %v591 = vld [vmem:[%s590] sm:$0xf]
    %vm592 = vcmp.gt.f32.partialorder %v591, 0.0
    %s593 = scalar_lea.vmem [#allocation3], 8
    %v594 = vld [vmem:[%s593] sm:$0xf]
    %s595 = scalar_lea.vmem [#allocation4], 8
    %v596 = vld [vmem:[%s595] sm:$0xf]
    %s597 = scalar_lea.vmem [#allocation5], 8
    %v598 = vld [vmem:[%s597] sm:$0xf]
    %v599 = vpack.c.bf16 %v585, %v585
    %v601 = vsel %vm240, %v599, 0
    %603 = vmatpush.bf16.msra.mxu0 0
    %604 = vmatpush.bf16.msra.mxu0 0
    %605 = vmatpush.bf16.msra.mxu0 0
    %606 = vmatpush.bf16.msra.mxu0 0
    %607 = vmatpush.bf16.msra.mxu0 0
    %608 = vmatpush.bf16.msra.mxu0 0
    %609 = vmatpush.bf16.msra.mxu0 %v408
    %610 = vmatpush.bf16.msra.mxu0 %v407
    %611 = vmatmul.bf16.gmra.mxu0 %v601
    %v612 = vpop.f32.mrf.mxu0
    %v613 = vadd.f32 0.0, %v612
    %v614 = vpop.f32.mrf.mxu0
    %615 = vdwg.mxu0
    %v616 = vadd.f32 %v594, %v613
    %v617 = vxor.u32 %v616, 2147483648
    %v618 = vmul.f32 %v617, 1.442695
    %v619 = vpow.pop %v618
    %v620 = vadd.f32 %v619, 1.0
    %v621 = vrcp.pop %v620
    %v622 = vmul.f32 %v620, %v621
    %v623 = vsub.f32 1.0, %v622
    %v624 = vmul.f32 %v621, %v623
    %v625 = vadd.f32 %v621, %v624
    %vm626 = vweird.f32 %v620
    %vm627 = vweird.f32 %v621
    %vm628 = vmor %vm626, %vm627
    %v629 = vsel %vm628, %v621, %v625
    %v630 = vand.u32 2147483647, %v620
    %vm631 = vcmp.eq.f32.partialorder %v630, 8.507059e+37
    %v632 = vand.u32 %v620, 2147483648
    %v633 = vor.u32 1.1754944e-38, %v632
    %v634 = vsel %vm631, %v633, %v629
    %v635 = vmul.f32 1.0, %v634
    %637 = vrot.lane.b32.xlu0 %v613, 96
    %v638 = vpop.permute.xlu0 %637
    %v640 = vadd.f32 %v596, %v638
    %v641 = vxor.u32 %v640, 2147483648
    %v642 = vmul.f32 %v641, 1.442695
    %v643 = vpow.pop %v642
    %v644 = vadd.f32 %v643, 1.0
    %v645 = vrcp.pop %v644
    %v646 = vmul.f32 %v644, %v645
    %v647 = vsub.f32 1.0, %v646
    %v648 = vmul.f32 %v645, %v647
    %v649 = vadd.f32 %v645, %v648
    %vm650 = vweird.f32 %v644
    %vm651 = vweird.f32 %v645
    %vm652 = vmor %vm650, %vm651
    %v653 = vsel %vm652, %v645, %v649
    %v654 = vand.u32 2147483647, %v644
    %vm655 = vcmp.eq.f32.partialorder %v654, 8.507059e+37
    %v656 = vand.u32 %v644, 2147483648
    %v657 = vor.u32 1.1754944e-38, %v656
    %v658 = vsel %vm655, %v657, %v653
    %v659 = vmul.f32 1.0, %v658
    %v660 = vadd.f32 %v613, %v474
    %662 = vrot.lane.b32.xlu0 %v660, 64
    %v663 = vpop.permute.xlu0 %662
    %v665 = vmul.f32 %v635, %v663
    %v666 = vadd.f32 %v598, %v665
    %v667 = vtanh.pop %v666
    %v668 = vsub.f32 1.0, %v659
    %v669 = vmul.f32 %v668, %v667
    %v670 = vmul.f32 %v659, %v585
    %v671 = vadd.f32 %v669, %v670
    %v672 = vsel %vm592, 1, 0
    %673 = vset.pattern.permute.xlu0 0
    %674 = vperm.xlu0 %673, %v672
    %v675 = vpop.permute.xlu0 %674
    %vm676 = vcmp.eq.s32.totalorder %v675, 1
    %v677 = vsel %vm676, %v671, %v585
    %v678 = vsel %vm676, %v671, 0.0
    %v679 = vpack.c.bf16 %v678, %v678
    %s680 = scalar_lea.vmem [#allocation15], 4
    %681 = vst.msk [vmem:[%s680] sm:$0x3] %vm496, %v679
    %s682 = scalar_lea.vmem [#allocation6], 12
    %v683 = vld [vmem:[%s682] sm:$0xf]
    %vm684 = vcmp.gt.f32.partialorder %v683, 0.0
    %s685 = scalar_lea.vmem [#allocation3], 12
    %v686 = vld [vmem:[%s685] sm:$0xf]
    %s687 = scalar_lea.vmem [#allocation4], 12
    %v688 = vld [vmem:[%s687] sm:$0xf]
    %s689 = scalar_lea.vmem [#allocation5], 12
    %v690 = vld [vmem:[%s689] sm:$0xf]
    %v691 = vpack.c.bf16 %v677, %v677
    %v693 = vsel %vm240, %v691, 0
    %695 = vmatpush.bf16.msra.mxu0 0
    %696 = vmatpush.bf16.msra.mxu0 0
    %697 = vmatpush.bf16.msra.mxu0 0
    %698 = vmatpush.bf16.msra.mxu0 0
    %699 = vmatpush.bf16.msra.mxu0 0
    %700 = vmatpush.bf16.msra.mxu0 0
    %701 = vmatpush.bf16.msra.mxu0 %v408
    %702 = vmatpush.bf16.msra.mxu0 %v407
    %703 = vmatmul.bf16.gmra.mxu0 %v693
    %v704 = vpop.f32.mrf.mxu0
    %v705 = vadd.f32 0.0, %v704
    %v706 = vpop.f32.mrf.mxu0
    %707 = vdwg.mxu0
    %v708 = vadd.f32 %v686, %v705
    %v709 = vxor.u32 %v708, 2147483648
    %v710 = vmul.f32 %v709, 1.442695
    %v711 = vpow.pop %v710
    %v712 = vadd.f32 %v711, 1.0
    %v713 = vrcp.pop %v712
    %v714 = vmul.f32 %v712, %v713
    %v715 = vsub.f32 1.0, %v714
    %v716 = vmul.f32 %v713, %v715
    %v717 = vadd.f32 %v713, %v716
    %vm718 = vweird.f32 %v712
    %vm719 = vweird.f32 %v713
    %vm720 = vmor %vm718, %vm719
    %v721 = vsel %vm720, %v713, %v717
    %v722 = vand.u32 2147483647, %v712
    %vm723 = vcmp.eq.f32.partialorder %v722, 8.507059e+37
    %v724 = vand.u32 %v712, 2147483648
    %v725 = vor.u32 1.1754944e-38, %v724
    %v726 = vsel %vm723, %v725, %v721
    %v727 = vmul.f32 1.0, %v726
    %729 = vrot.lane.b32.xlu0 %v705, 96
    %v730 = vpop.permute.xlu0 %729
    %v732 = vadd.f32 %v688, %v730
    %v733 = vxor.u32 %v732, 2147483648
    %v734 = vmul.f32 %v733, 1.442695
    %v735 = vpow.pop %v734
    %v736 = vadd.f32 %v735, 1.0
    %v737 = vrcp.pop %v736
    %v738 = vmul.f32 %v736, %v737
    %v739 = vsub.f32 1.0, %v738
    %v740 = vmul.f32 %v737, %v739
    %v741 = vadd.f32 %v737, %v740
    %vm742 = vweird.f32 %v736
    %vm743 = vweird.f32 %v737
    %vm744 = vmor %vm742, %vm743
    %v745 = vsel %vm744, %v737, %v741
    %v746 = vand.u32 2147483647, %v736
    %vm747 = vcmp.eq.f32.partialorder %v746, 8.507059e+37
    %v748 = vand.u32 %v736, 2147483648
    %v749 = vor.u32 1.1754944e-38, %v748
    %v750 = vsel %vm747, %v749, %v745
    %v751 = vmul.f32 1.0, %v750
    %v752 = vadd.f32 %v705, %v474
    %754 = vrot.lane.b32.xlu0 %v752, 64
    %v755 = vpop.permute.xlu0 %754
    %v757 = vmul.f32 %v727, %v755
    %v758 = vadd.f32 %v690, %v757
    %v759 = vtanh.pop %v758
    %v760 = vsub.f32 1.0, %v751
    %v761 = vmul.f32 %v760, %v759
    %v762 = vmul.f32 %v751, %v677
    %v763 = vadd.f32 %v761, %v762
    %v764 = vsel %vm684, 1, 0
    %765 = vset.pattern.permute.xlu0 0
    %766 = vperm.xlu0 %765, %v764
    %v767 = vpop.permute.xlu0 %766
    %vm768 = vcmp.eq.s32.totalorder %v767, 1
    %v769 = vsel %vm768, %v763, %v677
    %v770 = vsel %vm768, %v763, 0.0
    %v771 = vpack.c.bf16 %v770, %v770
    %s772 = scalar_lea.vmem [#allocation15], 6
    %773 = vst.msk [vmem:[%s772] sm:$0x3] %vm496, %v771
    %s774 = scalar_lea.vmem [#allocation6], 16
    %v775 = vld [vmem:[%s774] sm:$0xf]
    %vm776 = vcmp.gt.f32.partialorder %v775, 0.0
    %s777 = scalar_lea.vmem [#allocation3], 16
    %v778 = vld [vmem:[%s777] sm:$0xf]
    %s779 = scalar_lea.vmem [#allocation4], 16
    %v780 = vld [vmem:[%s779] sm:$0xf]
    %s781 = scalar_lea.vmem [#allocation5], 16
    %v782 = vld [vmem:[%s781] sm:$0xf]
    %v783 = vpack.c.bf16 %v769, %v769
    %v785 = vsel %vm240, %v783, 0
    %787 = vmatpush.bf16.msra.mxu0 0
    %788 = vmatpush.bf16.msra.mxu0 0
    %789 = vmatpush.bf16.msra.mxu0 0
    %790 = vmatpush.bf16.msra.mxu0 0
    %791 = vmatpush.bf16.msra.mxu0 0
    %792 = vmatpush.bf16.msra.mxu0 0
    %793 = vmatpush.bf16.msra.mxu0 %v408
    %794 = vmatpush.bf16.msra.mxu0 %v407
    %795 = vmatmul.bf16.gmra.mxu0 %v785
    %v796 = vpop.f32.mrf.mxu0
    %v797 = vadd.f32 0.0, %v796
    %v798 = vpop.f32.mrf.mxu0
    %799 = vdwg.mxu0
    %v800 = vadd.f32 %v778, %v797
    %v801 = vxor.u32 %v800, 2147483648
    %v802 = vmul.f32 %v801, 1.442695
    %v803 = vpow.pop %v802
    %v804 = vadd.f32 %v803, 1.0
    %v805 = vrcp.pop %v804
    %v806 = vmul.f32 %v804, %v805
    %v807 = vsub.f32 1.0, %v806
    %v808 = vmul.f32 %v805, %v807
    %v809 = vadd.f32 %v805, %v808
    %vm810 = vweird.f32 %v804
    %vm811 = vweird.f32 %v805
    %vm812 = vmor %vm810, %vm811
    %v813 = vsel %vm812, %v805, %v809
    %v814 = vand.u32 2147483647, %v804
    %vm815 = vcmp.eq.f32.partialorder %v814, 8.507059e+37
    %v816 = vand.u32 %v804, 2147483648
    %v817 = vor.u32 1.1754944e-38, %v816
    %v818 = vsel %vm815, %v817, %v813
    %v819 = vmul.f32 1.0, %v818
    %821 = vrot.lane.b32.xlu0 %v797, 96
    %v822 = vpop.permute.xlu0 %821
    %v824 = vadd.f32 %v780, %v822
    %v825 = vxor.u32 %v824, 2147483648
    %v826 = vmul.f32 %v825, 1.442695
    %v827 = vpow.pop %v826
    %v828 = vadd.f32 %v827, 1.0
    %v829 = vrcp.pop %v828
    %v830 = vmul.f32 %v828, %v829
    %v831 = vsub.f32 1.0, %v830
    %v832 = vmul.f32 %v829, %v831
    %v833 = vadd.f32 %v829, %v832
    %vm834 = vweird.f32 %v828
    %vm835 = vweird.f32 %v829
    %vm836 = vmor %vm834, %vm835
    %v837 = vsel %vm836, %v829, %v833
    %v838 = vand.u32 2147483647, %v828
    %vm839 = vcmp.eq.f32.partialorder %v838, 8.507059e+37
    %v840 = vand.u32 %v828, 2147483648
    %v841 = vor.u32 1.1754944e-38, %v840
    %v842 = vsel %vm839, %v841, %v837
    %v843 = vmul.f32 1.0, %v842
    %v844 = vadd.f32 %v797, %v474
    %846 = vrot.lane.b32.xlu0 %v844, 64
    %v847 = vpop.permute.xlu0 %846
    %v849 = vmul.f32 %v819, %v847
    %v850 = vadd.f32 %v782, %v849
    %v851 = vtanh.pop %v850
    %v852 = vsub.f32 1.0, %v843
    %v853 = vmul.f32 %v852, %v851
    %v854 = vmul.f32 %v843, %v769
    %v855 = vadd.f32 %v853, %v854
    %v856 = vsel %vm776, 1, 0
    %857 = vset.pattern.permute.xlu0 0
    %858 = vperm.xlu0 %857, %v856
    %v859 = vpop.permute.xlu0 %858
    %vm860 = vcmp.eq.s32.totalorder %v859, 1
    %v861 = vsel %vm860, %v855, %v769
    %v862 = vsel %vm860, %v855, 0.0
    %v863 = vpack.c.bf16 %v862, %v862
    %s864 = scalar_lea.vmem [#allocation15], 8
    %865 = vst.msk [vmem:[%s864] sm:$0x3] %vm496, %v863
    %s866 = scalar_lea.vmem [#allocation6], 20
    %v867 = vld [vmem:[%s866] sm:$0xf]
    %vm868 = vcmp.gt.f32.partialorder %v867, 0.0
    %s869 = scalar_lea.vmem [#allocation3], 20
    %v870 = vld [vmem:[%s869] sm:$0xf]
    %s871 = scalar_lea.vmem [#allocation4], 20
    %v872 = vld [vmem:[%s871] sm:$0xf]
    %s873 = scalar_lea.vmem [#allocation5], 20
    %v874 = vld [vmem:[%s873] sm:$0xf]
    %v875 = vpack.c.bf16 %v861, %v861
    %v877 = vsel %vm240, %v875, 0
    %879 = vmatpush.bf16.msra.mxu0 0
    %880 = vmatpush.bf16.msra.mxu0 0
    %881 = vmatpush.bf16.msra.mxu0 0
    %882 = vmatpush.bf16.msra.mxu0 0
    %883 = vmatpush.bf16.msra.mxu0 0
    %884 = vmatpush.bf16.msra.mxu0 0
    %885 = vmatpush.bf16.msra.mxu0 %v408
    %886 = vmatpush.bf16.msra.mxu0 %v407
    %887 = vmatmul.bf16.gmra.mxu0 %v877
    %v888 = vpop.f32.mrf.mxu0
    %v889 = vadd.f32 0.0, %v888
    %v890 = vpop.f32.mrf.mxu0
    %891 = vdwg.mxu0
    %v892 = vadd.f32 %v870, %v889
    %v893 = vxor.u32 %v892, 2147483648
    %v894 = vmul.f32 %v893, 1.442695
    %v895 = vpow.pop %v894
    %v896 = vadd.f32 %v895, 1.0
    %v897 = vrcp.pop %v896
    %v898 = vmul.f32 %v896, %v897
    %v899 = vsub.f32 1.0, %v898
    %v900 = vmul.f32 %v897, %v899
    %v901 = vadd.f32 %v897, %v900
    %vm902 = vweird.f32 %v896
    %vm903 = vweird.f32 %v897
    %vm904 = vmor %vm902, %vm903
    %v905 = vsel %vm904, %v897, %v901
    %v906 = vand.u32 2147483647, %v896
    %vm907 = vcmp.eq.f32.partialorder %v906, 8.507059e+37
    %v908 = vand.u32 %v896, 2147483648
    %v909 = vor.u32 1.1754944e-38, %v908
    %v910 = vsel %vm907, %v909, %v905
    %v911 = vmul.f32 1.0, %v910
    %913 = vrot.lane.b32.xlu0 %v889, 96
    %v914 = vpop.permute.xlu0 %913
    %v916 = vadd.f32 %v872, %v914
    %v917 = vxor.u32 %v916, 2147483648
    %v918 = vmul.f32 %v917, 1.442695
    %v919 = vpow.pop %v918
    %v920 = vadd.f32 %v919, 1.0
    %v921 = vrcp.pop %v920
    %v922 = vmul.f32 %v920, %v921
    %v923 = vsub.f32 1.0, %v922
    %v924 = vmul.f32 %v921, %v923
    %v925 = vadd.f32 %v921, %v924
    %vm926 = vweird.f32 %v920
    %vm927 = vweird.f32 %v921
    %vm928 = vmor %vm926, %vm927
    %v929 = vsel %vm928, %v921, %v925
    %v930 = vand.u32 2147483647, %v920
    %vm931 = vcmp.eq.f32.partialorder %v930, 8.507059e+37
    %v932 = vand.u32 %v920, 2147483648
    %v933 = vor.u32 1.1754944e-38, %v932
    %v934 = vsel %vm931, %v933, %v929
    %v935 = vmul.f32 1.0, %v934
    %v936 = vadd.f32 %v889, %v474
    %938 = vrot.lane.b32.xlu0 %v936, 64
    %v939 = vpop.permute.xlu0 %938
    %v941 = vmul.f32 %v911, %v939
    %v942 = vadd.f32 %v874, %v941
    %v943 = vtanh.pop %v942
    %v944 = vsub.f32 1.0, %v935
    %v945 = vmul.f32 %v944, %v943
    %v946 = vmul.f32 %v935, %v861
    %v947 = vadd.f32 %v945, %v946
    %v948 = vsel %vm868, 1, 0
    %949 = vset.pattern.permute.xlu0 0
    %950 = vperm.xlu0 %949, %v948
    %v951 = vpop.permute.xlu0 %950
    %vm952 = vcmp.eq.s32.totalorder %v951, 1
    %v953 = vsel %vm952, %v947, %v861
    %v954 = vsel %vm952, %v947, 0.0
    %v955 = vpack.c.bf16 %v954, %v954
    %s956 = scalar_lea.vmem [#allocation15], 10
    %957 = vst.msk [vmem:[%s956] sm:$0x3] %vm496, %v955
    %s958 = scalar_lea.vmem [#allocation6], 24
    %v959 = vld [vmem:[%s958] sm:$0xf]
    %vm960 = vcmp.gt.f32.partialorder %v959, 0.0
    %s961 = scalar_lea.vmem [#allocation3], 24
    %v962 = vld [vmem:[%s961] sm:$0xf]
    %s963 = scalar_lea.vmem [#allocation4], 24
    %v964 = vld [vmem:[%s963] sm:$0xf]
    %s965 = scalar_lea.vmem [#allocation5], 24
    %v966 = vld [vmem:[%s965] sm:$0xf]
    %v967 = vpack.c.bf16 %v953, %v953
    %v969 = vsel %vm240, %v967, 0
    %971 = vmatpush.bf16.msra.mxu0 0
    %972 = vmatpush.bf16.msra.mxu0 0
    %973 = vmatpush.bf16.msra.mxu0 0
    %974 = vmatpush.bf16.msra.mxu0 0
    %975 = vmatpush.bf16.msra.mxu0 0
    %976 = vmatpush.bf16.msra.mxu0 0
    %977 = vmatpush.bf16.msra.mxu0 %v408
    %978 = vmatpush.bf16.msra.mxu0 %v407
    %979 = vmatmul.bf16.gmra.mxu0 %v969
    %v980 = vpop.f32.mrf.mxu0
    %v981 = vadd.f32 0.0, %v980
    %v982 = vpop.f32.mrf.mxu0
    %983 = vdwg.mxu0
    %v984 = vadd.f32 %v962, %v981
    %v985 = vxor.u32 %v984, 2147483648
    %v986 = vmul.f32 %v985, 1.442695
    %v987 = vpow.pop %v986
    %v988 = vadd.f32 %v987, 1.0
    %v989 = vrcp.pop %v988
    %v990 = vmul.f32 %v988, %v989
    %v991 = vsub.f32 1.0, %v990
    %v992 = vmul.f32 %v989, %v991
    %v993 = vadd.f32 %v989, %v992
    %vm994 = vweird.f32 %v988
    %vm995 = vweird.f32 %v989
    %vm996 = vmor %vm994, %vm995
    %v997 = vsel %vm996, %v989, %v993
    %v998 = vand.u32 2147483647, %v988
    %vm999 = vcmp.eq.f32.partialorder %v998, 8.507059e+37
    %v1000 = vand.u32 %v988, 2147483648
    %v1001 = vor.u32 1.1754944e-38, %v1000
    %v1002 = vsel %vm999, %v1001, %v997
    %v1003 = vmul.f32 1.0, %v1002
    %1005 = vrot.lane.b32.xlu0 %v981, 96
    %v1006 = vpop.permute.xlu0 %1005
    %v1008 = vadd.f32 %v964, %v1006
    %v1009 = vxor.u32 %v1008, 2147483648
    %v1010 = vmul.f32 %v1009, 1.442695
    %v1011 = vpow.pop %v1010
    %v1012 = vadd.f32 %v1011, 1.0
    %v1013 = vrcp.pop %v1012
    %v1014 = vmul.f32 %v1012, %v1013
    %v1015 = vsub.f32 1.0, %v1014
    %v1016 = vmul.f32 %v1013, %v1015
    %v1017 = vadd.f32 %v1013, %v1016
    %vm1018 = vweird.f32 %v1012
    %vm1019 = vweird.f32 %v1013
    %vm1020 = vmor %vm1018, %vm1019
    %v1021 = vsel %vm1020, %v1013, %v1017
    %v1022 = vand.u32 2147483647, %v1012
    %vm1023 = vcmp.eq.f32.partialorder %v1022, 8.507059e+37
    %v1024 = vand.u32 %v1012, 2147483648
    %v1025 = vor.u32 1.1754944e-38, %v1024
    %v1026 = vsel %vm1023, %v1025, %v1021
    %v1027 = vmul.f32 1.0, %v1026
    %v1028 = vadd.f32 %v981, %v474
    %1030 = vrot.lane.b32.xlu0 %v1028, 64
    %v1031 = vpop.permute.xlu0 %1030
    %v1033 = vmul.f32 %v1003, %v1031
    %v1034 = vadd.f32 %v966, %v1033
    %v1035 = vtanh.pop %v1034
    %v1036 = vsub.f32 1.0, %v1027
    %v1037 = vmul.f32 %v1036, %v1035
    %v1038 = vmul.f32 %v1027, %v953
    %v1039 = vadd.f32 %v1037, %v1038
    %v1040 = vsel %vm960, 1, 0
    %1041 = vset.pattern.permute.xlu0 0
    %1042 = vperm.xlu0 %1041, %v1040
    %v1043 = vpop.permute.xlu0 %1042
    %vm1044 = vcmp.eq.s32.totalorder %v1043, 1
    %v1045 = vsel %vm1044, %v1039, %v953
    %v1046 = vsel %vm1044, %v1039, 0.0
    %v1047 = vpack.c.bf16 %v1046, %v1046
    %s1048 = scalar_lea.vmem [#allocation15], 12
    %1049 = vst.msk [vmem:[%s1048] sm:$0x3] %vm496, %v1047
    %s1050 = scalar_lea.vmem [#allocation6], 28
    %v1051 = vld [vmem:[%s1050] sm:$0xf]
    %vm1052 = vcmp.gt.f32.partialorder %v1051, 0.0
    %s1053 = scalar_lea.vmem [#allocation3], 28
    %v1054 = vld [vmem:[%s1053] sm:$0xf]
    %s1055 = scalar_lea.vmem [#allocation4], 28
    %v1056 = vld [vmem:[%s1055] sm:$0xf]
    %s1057 = scalar_lea.vmem [#allocation5], 28
    %v1058 = vld [vmem:[%s1057] sm:$0xf]
    %v1059 = vpack.c.bf16 %v1045, %v1045
    %v1061 = vsel %vm240, %v1059, 0
    %1063 = vmatpush.bf16.msra.mxu0 0
    %1064 = vmatpush.bf16.msra.mxu0 0
    %1065 = vmatpush.bf16.msra.mxu0 0
    %1066 = vmatpush.bf16.msra.mxu0 0
    %1067 = vmatpush.bf16.msra.mxu0 0
    %1068 = vmatpush.bf16.msra.mxu0 0
    %1069 = vmatpush.bf16.msra.mxu0 %v408
    %1070 = vmatpush.bf16.msra.mxu0 %v407
    %1071 = vmatmul.bf16.gmra.mxu0 %v1061
    %v1072 = vpop.f32.mrf.mxu0
    %v1073 = vadd.f32 0.0, %v1072
    %v1074 = vpop.f32.mrf.mxu0
    %1075 = vdwg.mxu0
    %v1076 = vadd.f32 %v1054, %v1073
    %v1077 = vxor.u32 %v1076, 2147483648
    %v1078 = vmul.f32 %v1077, 1.442695
    %v1079 = vpow.pop %v1078
    %v1080 = vadd.f32 %v1079, 1.0
    %v1081 = vrcp.pop %v1080
    %v1082 = vmul.f32 %v1080, %v1081
    %v1083 = vsub.f32 1.0, %v1082
    %v1084 = vmul.f32 %v1081, %v1083
    %v1085 = vadd.f32 %v1081, %v1084
    %vm1086 = vweird.f32 %v1080
    %vm1087 = vweird.f32 %v1081
    %vm1088 = vmor %vm1086, %vm1087
    %v1089 = vsel %vm1088, %v1081, %v1085
    %v1090 = vand.u32 2147483647, %v1080
    %vm1091 = vcmp.eq.f32.partialorder %v1090, 8.507059e+37
    %v1092 = vand.u32 %v1080, 2147483648
    %v1093 = vor.u32 1.1754944e-38, %v1092
    %v1094 = vsel %vm1091, %v1093, %v1089
    %v1095 = vmul.f32 1.0, %v1094
    %1097 = vrot.lane.b32.xlu0 %v1073, 96
    %v1098 = vpop.permute.xlu0 %1097
    %v1100 = vadd.f32 %v1056, %v1098
    %v1101 = vxor.u32 %v1100, 2147483648
    %v1102 = vmul.f32 %v1101, 1.442695
    %v1103 = vpow.pop %v1102
    %v1104 = vadd.f32 %v1103, 1.0
    %v1105 = vrcp.pop %v1104
    %v1106 = vmul.f32 %v1104, %v1105
    %v1107 = vsub.f32 1.0, %v1106
    %v1108 = vmul.f32 %v1105, %v1107
    %v1109 = vadd.f32 %v1105, %v1108
    %vm1110 = vweird.f32 %v1104
    %vm1111 = vweird.f32 %v1105
    %vm1112 = vmor %vm1110, %vm1111
    %v1113 = vsel %vm1112, %v1105, %v1109
    %v1114 = vand.u32 2147483647, %v1104
    %vm1115 = vcmp.eq.f32.partialorder %v1114, 8.507059e+37
    %v1116 = vand.u32 %v1104, 2147483648
    %v1117 = vor.u32 1.1754944e-38, %v1116
    %v1118 = vsel %vm1115, %v1117, %v1113
    %v1119 = vmul.f32 1.0, %v1118
    %v1120 = vadd.f32 %v1073, %v474
    %1122 = vrot.lane.b32.xlu0 %v1120, 64
    %v1123 = vpop.permute.xlu0 %1122
    %v1125 = vmul.f32 %v1095, %v1123
    %v1126 = vadd.f32 %v1058, %v1125
    %v1127 = vtanh.pop %v1126
    %v1128 = vsub.f32 1.0, %v1119
    %v1129 = vmul.f32 %v1128, %v1127
    %v1130 = vmul.f32 %v1119, %v1045
    %v1131 = vadd.f32 %v1129, %v1130
    %v1132 = vsel %vm1052, 1, 0
    %1133 = vset.pattern.permute.xlu0 0
    %1134 = vperm.xlu0 %1133, %v1132
    %v1135 = vpop.permute.xlu0 %1134
    %vm1136 = vcmp.eq.s32.totalorder %v1135, 1
    %v1137 = vsel %vm1136, %v1131, %v1045
    %v1138 = vsel %vm1136, %v1131, 0.0
    %v1139 = vpack.c.bf16 %v1138, %v1138
    %s1140 = scalar_lea.vmem [#allocation15], 14
    %1141 = vst.msk [vmem:[%s1140] sm:$0x3] %vm496, %v1139
    %1142 = vst.msk [vmem:[#allocation2] sm:$0xf] %vm276, %v1137
    // Predicated region
    $region86: #{tpu_custom_call.1} parent=1 // pred_check
      _
    $region87: #{tpu_custom_call.1} parent=1 // pred_check_branch
      %1144 = sbr.rel (0) target = $region89
    $region88: #{tpu_custom_call.1} parent=1 // pred_region
      %1146 = vsyncadd [#allocation14], 0
      %s1147 = sshll.u32 [#allocation15], 4
      %s1148 = int_to_ptr.vmem [resolvable:$true] %s1147
      %s1149 = sshll.u32 %s6, 4
      %s1150 = int_to_ptr.hbm [resolvable:$true] %s1149
      %1155 = dma.vmem_to_hbm [thread:$0]  %s1148, 256, %s1150, [#allocation14], 32, 32, 2
    $region89: #{tpu_custom_call.1} parent=1 // pred_fallthru
      _
    // Predicated region
    $region90: #{tpu_custom_call.1} parent=1 // pred_check
      _
    $region91: #{tpu_custom_call.1} parent=1 // pred_check_branch
      %1157 = sbr.rel (0) target = $region93
    $region92: #{tpu_custom_call.1} parent=1 // pred_region
      %1159 = dma.done [#allocation14], 256
    $region93: #{tpu_custom_call.1} parent=1 // pred_fallthru
      _
    %1160 = vsyncpa [#allocation13], 1
    %1161 = vsyncpa [#allocation14], 1
  %1162 = vsyncmov [#allocation11]
  %s1163 = vpop.sfrf %1162
  %p1164 = scmp.eq.s32.totalorder %s1163, 0
  %p1165 = pneg %p1164
  %1167 = shalt.err (%p1165)

</llo_original>
